<compile_context>
chip_gen: v6e
topology: v6e:2x2x1
jax: 0.10.0
libtpu: 0.0.40
codegen_flags: <defaults>
</compile_context>

<pallas_src>
import jax
import jax.numpy as jnp
from jax import lax
from jax.experimental import pallas as pl
from jax.experimental.pallas import tpu as pltpu

WINDOW = 15            # PolicyNetwork.WINDOW_SIZE
POOLED = WINDOW // 2   # MaxPool2d(2,2) on 15 -> 7 (floor mode drops row/col 14)
NEG_SLOPE = 0.01       # nn.LeakyReLU default


def _leaky_relu(x):
    return jnp.where(x > 0, x, NEG_SLOPE * x)


def _round_up(x, m):
    return ((x + m - 1) // m) * m


# --------------------------------------------------------------------------- #
# Kernel
# --------------------------------------------------------------------------- #
def policy_kernel(x_ref, s_ref, cbd_ref, cb_ref, w1c_ref, w1s_ref, b1_ref,
                  w2_ref, b2_ref, w3_ref, b3_ref, out_ref):
    """Fused conv(im2col on MXU) + LeakyReLU + MaxPool + 3-layer fc head.

    x_ref   : (1, 7, 4*tb, 7*9*Cin) bf16  M-stacked im2col patches
                                          rows [q*tb:(q+1)*tb] = pool quadrant q
    s_ref   : (tb, n_obs)           bf16  observations
    cbd_ref : (7*9*Cin, 7*Cout)     bf16  block-diagonal conv weight kron(I7, cw)
    cb_ref  : (1, 7*Cout)           f32   conv bias tiled over pool columns
    w1c_ref : (7, 7*Cout, H)        bf16  fc1 weight slices for conv features (row i)
    w1s_ref : (n_obs, H)            bf16  fc1 weight slice for observations
    b1..b3  : (1, N)                f32   fc biases
    w2, w3  : (in, out)             bf16  fc weights (pre-transposed)
    out_ref : (tb, n_actions)       f32
    """
    tb = out_ref.shape[0]
    cbd = cbd_ref[...]                       # hoisted: loaded once, reused 7x
    cb = cb_ref[...]

    # fc1: observation part first, then accumulate the 7 pooled rows (f32 acc).
    h1 = jnp.dot(s_ref[...], w1s_ref[...],
                 preferred_element_type=jnp.float32) + b1_ref[...]

    for ip in range(POOLED):
        # One M-stacked MXU matmul per pooled row: all 4 quadrants at once.
        z = jnp.dot(x_ref[0, ip], cbd,
                    preferred_element_type=jnp.float32)        # (4*tb, 7*Cout) f32
        # MaxPool2d(2,2): 4-way elementwise max over aligned sublane slices.
        # Bias + LeakyReLU commute with max (monotone, per-channel bias).
        m = jnp.maximum(jnp.maximum(z[0:tb], z[tb:2 * tb]),
                        jnp.maximum(z[2 * tb:3 * tb], z[3 * tb:4 * tb]))
        pooled = _leaky_relu(m + cb).astype(jnp.bfloat16)       # (tb, 7*Cout)
        h1 = h1 + jnp.dot(pooled, w1c_ref[ip],
                          preferred_element_type=jnp.float32)

    h1 = _leaky_relu(h1).astype(jnp.bfloat16)
    h2 = _leaky_relu(jnp.dot(h1, w2_ref[...],
                             preferred_element_type=jnp.float32) + b2_ref[...])
    h2 = h2.astype(jnp.bfloat16)
    out_ref[...] = jnp.dot(h2, w3_ref[...],
                           preferred_element_type=jnp.float32) + b3_ref[...]


# --------------------------------------------------------------------------- #
# One-time parameter preprocessing (hoisted out of the per-call wrapper)
# --------------------------------------------------------------------------- #
def prepare_params(params):
    """PyTorch-layout params -> kernel-ready bf16 params (call once)."""
    conv_w, conv_b, W1, b1, W2, b2, W3, b3 = params
    cout, cin = conv_w.shape[0], conv_w.shape[1]
    hidden = W1.shape[0]
    half = W2.shape[0]
    n_actions = W3.shape[0]
    kdim = 9 * cin
    pc = POOLED * cout
    conv_feats = POOLED * POOLED * cout

    # conv weight (O,I,3,3) -> (ky,kx,ci,co) -> (9*Cin, Cout) -> block-diag (pw, pc)
    cw = jnp.transpose(conv_w.astype(jnp.float32), (2, 3, 1, 0)).reshape(kdim, cout)
    cbd = jnp.kron(jnp.eye(POOLED, dtype=jnp.float32), cw).astype(jnp.bfloat16)
    cb = jnp.tile(conv_b.astype(jnp.float32), POOLED).reshape(1, pc)

    # fc1 split + permutation matching PyTorch NCHW flatten: feature q = c*49+i*7+j,
    # kernel lane for pooled row i is j*Cout + c.
    W1c = W1[:, :conv_feats].reshape(hidden, cout, POOLED, POOLED)     # (h, c, i, j)
    w1c = jnp.transpose(W1c, (2, 3, 1, 0)).reshape(POOLED, pc, hidden)
    w1c = w1c.astype(jnp.bfloat16)
    w1s = W1[:, conv_feats:].T.astype(jnp.bfloat16)                    # (n_obs, h)
    w2 = W2.T.astype(jnp.bfloat16)                                     # (h, h/2)
    w3 = W3.T.astype(jnp.bfloat16)                                     # (h/2, A)
    b1r = b1.reshape(1, hidden).astype(jnp.float32)
    b2r = b2.reshape(1, half).astype(jnp.float32)
    b3r = b3.reshape(1, n_actions).astype(jnp.float32)
    return (cbd, cb, w1c, w1s, b1r, w2, b2r, w3, b3r)


# --------------------------------------------------------------------------- #
# Forward wrapper: layout glue (im2col via static slices) + one pallas_call
# --------------------------------------------------------------------------- #
def policy_forward(s, w_nchw, kparams, *, max_tile=256, interpret=False):
    cbd, cb, w1c, w1s, b1r, w2, b2r, w3, b3r = kparams
    B, cin = w_nchw.shape[0], w_nchw.shape[1]
    kdim = 9 * cin
    pw = POOLED * kdim                      # patch width per pooled row (7*9*Cin)
    pc = cbd.shape[1]                       # conv lanes per pooled row  (7*Cout)
    hidden = w1s.shape[1]
    half = w2.shape[1]
    n_actions = w3.shape[1]
    n_obs = s.shape[1]

    s = s.astype(jnp.bfloat16)

    # --- NCHW -> NHWC bf16, zero-pad H/W by 1 (the conv's padding=1) ----------
    img = jnp.transpose(w_nchw, (0, 2, 3, 1)).astype(jnp.bfloat16)
    img = jnp.pad(img, ((0, 0), (1, 1), (1, 1), (0, 0)))         # (B, 17, 17, Cin)

    # --- stride-1 im2col via 9 static slices (no advanced-index gather) -------
    # taps[b, y, x, t, ci] = img[b, y+ky, x+kx, ci],  t = ky*3 + kx
    taps = jnp.stack([img[:, ky:ky + WINDOW, kx:kx + WINDOW, :]
                      for ky in range(3) for kx in range(3)], axis=3)

    # --- per pooling-quadrant patches, lanes ordered (pool-col j, tap, ci) ----
    def quadrant(di, dj):
        p = taps[:, di:di + 2 * POOLED - 1:2, dj:dj + 2 * POOLED - 1:2]
        return jnp.transpose(p, (1, 0, 2, 3, 4)).reshape(POOLED, B, pw)

    x = jnp.stack([quadrant(0, 0), quadrant(0, 1),
                   quadrant(1, 0), quadrant(1, 1)], axis=1)       # (7, 4, B, pw)

    # --- batch tiling (tb rows, rounded so sublane slices stay 8-aligned) -----
    tb = max_tile if B > max_tile else _round_up(B, 8)
    Bp = _round_up(B, tb)
    if Bp != B:
        x = jnp.pad(x, ((0, 0), (0, 0), (0, Bp - B), (0, 0)))
        s = jnp.pad(s, ((0, Bp - B), (0, 0)))
    nblk = Bp // tb

    # M-stack the 4 quadrants per batch tile: block b is (POOLED, 4*tb, pw)
    x = x.reshape(POOLED, 4, nblk, tb, pw)
    x = jnp.transpose(x, (2, 0, 1, 3, 4)).reshape(nblk, POOLED, 4 * tb, pw)

    x_spec = pl.BlockSpec((1, POOLED, 4 * tb, pw), lambda b: (b, 0, 0, 0))
    s_spec = pl.BlockSpec((tb, n_obs), lambda b: (b, 0))

    def const_spec(arr):                    # weights stay VMEM-resident
        shape = arr.shape
        zero = (0,) * len(shape)
        return pl.BlockSpec(shape, lambda b, _z=zero: _z)

    weight_bytes = sum(int(a.size) * a.dtype.itemsize for a in kparams)
    x_block_bytes = POOLED * 4 * tb * pw * 2
    vmem_est = (3 * x_block_bytes + 3 * weight_bytes
                + 4 * tb * (hidden + n_obs + n_actions) * 4 + (4 << 20))
    vmem_limit = int(min(64 << 20, max(32 << 20, 2 * vmem_est)))

    flops = nblk * (POOLED * 2 * (4 * tb) * pw * pc          # conv matmuls
                    + POOLED * 2 * tb * pc * hidden          # fc1 conv part
                    + 2 * tb * n_obs * hidden                # fc1 obs part
                    + 2 * tb * hidden * half                 # fc2
                    + 2 * tb * half * n_actions)             # fc3
    bytes_accessed = (int(x.size) * 2 + int(s.size) * 2
                      + Bp * n_actions * 4 + weight_bytes)
    cost = pl.CostEstimate(flops=flops, transcendentals=0,
                           bytes_accessed=bytes_accessed)

    out = pl.pallas_call(
        policy_kernel,
        out_shape=jax.ShapeDtypeStruct((Bp, n_actions), jnp.float32),
        grid=(nblk,),
        in_specs=[x_spec, s_spec,
                  const_spec(cbd), const_spec(cb),
                  const_spec(w1c), const_spec(w1s), const_spec(b1r),
                  const_spec(w2), const_spec(b2r),
                  const_spec(w3), const_spec(b3r)],
        out_specs=pl.BlockSpec((tb, n_actions), lambda b: (b, 0)),
        compiler_params=pltpu.CompilerParams(
            dimension_semantics=("parallel",),
            vmem_limit_bytes=vmem_limit),
        cost_estimate=cost,
        interpret=interpret,
    )(x, s, cbd, cb, w1c, w1s, b1r, w2, b2r, w3, b3r)

    return out[:B]


# --------------------------------------------------------------------------- #
# Pure-JAX f32 reference with exact PyTorch semantics (NCHW, NCHW flatten)
# --------------------------------------------------------------------------- #
def reference_forward(s, w_nchw, params):
    conv_w, conv_b, W1, b1, W2, b2, W3, b3 = params
    out = lax.conv_general_dilated(
        w_nchw, conv_w, window_strides=(1, 1), padding=((1, 1), (1, 1)),
        dimension_numbers=("NCHW", "OIHW", "NCHW"))
    out = out + conv_b[None, :, None, None]
    out = jnp.where(out > 0, out, NEG_SLOPE * out)
    out = lax.reduce_window(out, -jnp.inf, lax.max,
                            (1, 1, 2, 2), (1, 1, 2, 2), "VALID")
    fw = out.reshape(out.shape[0], -1)
    y = jnp.concatenate([fw, s], axis=1)
    h1 = y @ W1.T + b1
    h1 = jnp.where(h1 > 0, h1, NEG_SLOPE * h1)
    h2 = h1 @ W2.T + b2
    h2 = jnp.where(h2 > 0, h2, NEG_SLOPE * h2)
    return h2 @ W3.T + b3


if __name__ == "__main__":
    # Small shapes consistent with the module.
    B = 2
    in_channels = 4
    h_channels = 8
    n_observations = 8
    n_actions = 6
    hidden_dim = 32

    conv_feats = POOLED * POOLED * h_channels
    input_dim = conv_feats + n_observations

    key = jax.random.PRNGKey(0)
    ks = jax.random.split(key, 10)

    # Deterministic synthetic parameters (PyTorch layouts: conv (O,I,kH,kW), fc (out,in)).
    conv_w = jax.random.uniform(ks[0], (h_channels, in_channels, 3, 3), jnp.float32, -0.3, 0.3)
    conv_b = jax.random.uniform(ks[1], (h_channels,), jnp.float32, -0.1, 0.1)
    W1 = jax.random.uniform(ks[2], (hidden_dim, input_dim), jnp.float32, -0.05, 0.05)
    b1 = jax.random.uniform(ks[3], (hidden_dim,), jnp.float32, -0.05, 0.05)
    W2 = jax.random.uniform(ks[4], (hidden_dim // 2, hidden_dim), jnp.float32, -0.1, 0.1)
    b2 = jax.random.uniform(ks[5], (hidden_dim // 2,), jnp.float32, -0.1, 0.1)
    W3 = jax.random.uniform(ks[6], (n_actions, hidden_dim // 2), jnp.float32, -0.1, 0.1)
    b3 = jax.random.uniform(ks[7], (n_actions,), jnp.float32, -0.1, 0.1)
    params = (conv_w, conv_b, W1, b1, W2, b2, W3, b3)

    # Inputs: x = (s, w) with s (B, n_obs), w (B, Cin, 15, 15) in NCHW.
    s = jax.random.normal(ks[8], (B, n_observations), jnp.float32)
    w = jax.random.normal(ks[9], (B, in_channels, WINDOW, WINDOW), jnp.float32)

    kparams = prepare_params(params)           # one-time prep, outside forward
    forward = jax.jit(policy_forward)

    scores = forward(s, w, kparams)
    scores = jax.block_until_ready(scores)
    assert scores.shape == (B, n_actions)

    ref = reference_forward(s, w, params)
    # bf16 inputs/weights with f32 accumulation: loosened tolerance vs f32 reference.
    if not bool(jnp.allclose(scores, ref, atol=2e-2, rtol=2e-2)):
        raise AssertionError("Pallas kernel output does not match reference")

    print("KERNEL_OK")
</pallas_src>

<mosaic_0001>
module attributes {stable_mosaic.version = 11 : i64} {
  func.func @policy_kernel(%arg0: i32, %arg1: memref<1x7x32x252xbf16, #tpu.memory_space<vmem>>, %arg2: memref<8x8xbf16, #tpu.memory_space<vmem>>, %arg3: memref<252x56xbf16, #tpu.memory_space<vmem>>, %arg4: memref<1x56xf32, #tpu.memory_space<vmem>>, %arg5: memref<7x56x32xbf16, #tpu.memory_space<vmem>>, %arg6: memref<8x32xbf16, #tpu.memory_space<vmem>>, %arg7: memref<1x32xf32, #tpu.memory_space<vmem>>, %arg8: memref<32x16xbf16, #tpu.memory_space<vmem>>, %arg9: memref<1x16xf32, #tpu.memory_space<vmem>>, %arg10: memref<16x6xbf16, #tpu.memory_space<vmem>>, %arg11: memref<1x6xf32, #tpu.memory_space<vmem>>, %arg12: memref<8x6xf32, #tpu.memory_space<vmem>>) attributes {dimension_semantics = [#tpu.dimension_semantics<parallel>], iteration_bounds = array<i64: 1>, scalar_prefetch = 0 : i64, scratch_operands = 0 : i64, tpu.core_type = #tpu.core_type<tc>, window_params = [{transform_indices = @transform_0, window_bounds = array<i64: 1, 7, 32, 252>}, {transform_indices = @transform_1, window_bounds = array<i64: 8, 8>}, {pipeline_mode = #tpu.pipeline_mode<synchronous>, transform_indices = @transform_2, window_bounds = array<i64: 252, 56>}, {pipeline_mode = #tpu.pipeline_mode<synchronous>, transform_indices = @transform_3, window_bounds = array<i64: 1, 56>}, {pipeline_mode = #tpu.pipeline_mode<synchronous>, transform_indices = @transform_4, window_bounds = array<i64: 7, 56, 32>}, {pipeline_mode = #tpu.pipeline_mode<synchronous>, transform_indices = @transform_5, window_bounds = array<i64: 8, 32>}, {pipeline_mode = #tpu.pipeline_mode<synchronous>, transform_indices = @transform_6, window_bounds = array<i64: 1, 32>}, {pipeline_mode = #tpu.pipeline_mode<synchronous>, transform_indices = @transform_7, window_bounds = array<i64: 32, 16>}, {pipeline_mode = #tpu.pipeline_mode<synchronous>, transform_indices = @transform_8, window_bounds = array<i64: 1, 16>}, {pipeline_mode = #tpu.pipeline_mode<synchronous>, transform_indices = @transform_9, window_bounds = array<i64: 16, 6>}, {pipeline_mode = #tpu.pipeline_mode<synchronous>, transform_indices = @transform_10, window_bounds = array<i64: 1, 6>}, {transform_indices = @transform_11, window_bounds = array<i64: 8, 6>}]} {
    %c0 = arith.constant 0 : index
    %c0_0 = arith.constant 0 : index
    %0 = vector.load %arg3[%c0, %c0_0] : memref<252x56xbf16, #tpu.memory_space<vmem>>, vector<252x56xbf16>
    %c0_1 = arith.constant 0 : index
    %c0_2 = arith.constant 0 : index
    %1 = vector.load %arg4[%c0_1, %c0_2] : memref<1x56xf32, #tpu.memory_space<vmem>>, vector<1x56xf32>
    %c0_3 = arith.constant 0 : index
    %c0_4 = arith.constant 0 : index
    %2 = vector.load %arg2[%c0_3, %c0_4] : memref<8x8xbf16, #tpu.memory_space<vmem>>, vector<8x8xbf16>
    %c0_5 = arith.constant 0 : index
    %c0_6 = arith.constant 0 : index
    %3 = vector.load %arg6[%c0_5, %c0_6] : memref<8x32xbf16, #tpu.memory_space<vmem>>, vector<8x32xbf16>
    %cst = arith.constant dense<0.000000e+00> : vector<8x32xf32>
    %4 = tpu.matmul %2, %3, %cst {dimension_numbers = #tpu.dot_dimension_numbers<[1], [0], [0], [1], [0, 0, 1, 1], [], []>} : vector<8x8xbf16>, vector<8x32xbf16>, vector<8x32xf32> -> vector<8x32xf32>
    %c0_7 = arith.constant 0 : index
    %c0_8 = arith.constant 0 : index
    %5 = vector.load %arg7[%c0_7, %c0_8] : memref<1x32xf32, #tpu.memory_space<vmem>>, vector<1x32xf32>
    %6 = vector.broadcast %5 : vector<1x32xf32> to vector<8x32xf32>
    %7 = arith.addf %4, %6 : vector<8x32xf32>
    %c0_9 = arith.constant 0 : index
    %c0_10 = arith.constant 0 : index
    %c0_11 = arith.constant 0 : index
    %c0_12 = arith.constant 0 : index
    %8 = vector.load %arg1[%c0_9, %c0_10, %c0_11, %c0_12] : memref<1x7x32x252xbf16, #tpu.memory_space<vmem>>, vector<1x1x32x252xbf16>
    %9 = vector.shape_cast %8 : vector<1x1x32x252xbf16> to vector<32x252xbf16>
    %cst_13 = arith.constant dense<0.000000e+00> : vector<32x56xf32>
    %10 = tpu.matmul %9, %0, %cst_13 {dimension_numbers = #tpu.dot_dimension_numbers<[1], [0], [0], [1], [0, 0, 1, 1], [], []>} : vector<32x252xbf16>, vector<252x56xbf16>, vector<32x56xf32> -> vector<32x56xf32>
    %11 = vector.extract_strided_slice %10 {offsets = [0, 0], sizes = [8, 56], strides = [1, 1]} : vector<32x56xf32> to vector<8x56xf32>
    %12 = vector.extract_strided_slice %10 {offsets = [8, 0], sizes = [8, 56], strides = [1, 1]} : vector<32x56xf32> to vector<8x56xf32>
    %13 = arith.maximumf %11, %12 : vector<8x56xf32>
    %14 = vector.extract_strided_slice %10 {offsets = [16, 0], sizes = [8, 56], strides = [1, 1]} : vector<32x56xf32> to vector<8x56xf32>
    %15 = vector.extract_strided_slice %10 {offsets = [24, 0], sizes = [8, 56], strides = [1, 1]} : vector<32x56xf32> to vector<8x56xf32>
    %16 = arith.maximumf %14, %15 : vector<8x56xf32>
    %17 = arith.maximumf %13, %16 : vector<8x56xf32>
    %18 = vector.broadcast %1 : vector<1x56xf32> to vector<8x56xf32>
    %19 = arith.addf %17, %18 : vector<8x56xf32>
    %cst_14 = arith.constant 0.000000e+00 : f32
    %20 = vector.broadcast %cst_14 : f32 to vector<8x56xf32>
    %21 = arith.cmpf ogt, %19, %20 : vector<8x56xf32>
    %cst_15 = arith.constant 0.00999999977 : f32
    %22 = vector.broadcast %cst_15 : f32 to vector<8x56xf32>
    %23 = arith.mulf %22, %19 : vector<8x56xf32>
    %24 = arith.select %21, %19, %23 : vector<8x56xi1>, vector<8x56xf32>
    %25 = arith.truncf %24 : vector<8x56xf32> to vector<8x56xbf16>
    %c0_16 = arith.constant 0 : index
    %c0_17 = arith.constant 0 : index
    %c0_18 = arith.constant 0 : index
    %26 = vector.load %arg5[%c0_16, %c0_17, %c0_18] : memref<7x56x32xbf16, #tpu.memory_space<vmem>>, vector<1x56x32xbf16>
    %27 = vector.shape_cast %26 : vector<1x56x32xbf16> to vector<56x32xbf16>
    %cst_19 = arith.constant dense<0.000000e+00> : vector<8x32xf32>
    %28 = tpu.matmul %25, %27, %cst_19 {dimension_numbers = #tpu.dot_dimension_numbers<[1], [0], [0], [1], [0, 0, 1, 1], [], []>} : vector<8x56xbf16>, vector<56x32xbf16>, vector<8x32xf32> -> vector<8x32xf32>
    %29 = arith.addf %7, %28 : vector<8x32xf32>
    %c0_20 = arith.constant 0 : index
    %c1 = arith.constant 1 : index
    %c0_21 = arith.constant 0 : index
    %c0_22 = arith.constant 0 : index
    %30 = vector.load %arg1[%c0_20, %c1, %c0_21, %c0_22] : memref<1x7x32x252xbf16, #tpu.memory_space<vmem>>, vector<1x1x32x252xbf16>
    %31 = vector.shape_cast %30 : vector<1x1x32x252xbf16> to vector<32x252xbf16>
    %cst_23 = arith.constant dense<0.000000e+00> : vector<32x56xf32>
    %32 = tpu.matmul %31, %0, %cst_23 {dimension_numbers = #tpu.dot_dimension_numbers<[1], [0], [0], [1], [0, 0, 1, 1], [], []>} : vector<32x252xbf16>, vector<252x56xbf16>, vector<32x56xf32> -> vector<32x56xf32>
    %33 = vector.extract_strided_slice %32 {offsets = [0, 0], sizes = [8, 56], strides = [1, 1]} : vector<32x56xf32> to vector<8x56xf32>
    %34 = vector.extract_strided_slice %32 {offsets = [8, 0], sizes = [8, 56], strides = [1, 1]} : vector<32x56xf32> to vector<8x56xf32>
    %35 = arith.maximumf %33, %34 : vector<8x56xf32>
    %36 = vector.extract_strided_slice %32 {offsets = [16, 0], sizes = [8, 56], strides = [1, 1]} : vector<32x56xf32> to vector<8x56xf32>
    %37 = vector.extract_strided_slice %32 {offsets = [24, 0], sizes = [8, 56], strides = [1, 1]} : vector<32x56xf32> to vector<8x56xf32>
    %38 = arith.maximumf %36, %37 : vector<8x56xf32>
    %39 = arith.maximumf %35, %38 : vector<8x56xf32>
    %40 = vector.broadcast %1 : vector<1x56xf32> to vector<8x56xf32>
    %41 = arith.addf %39, %40 : vector<8x56xf32>
    %cst_24 = arith.constant 0.000000e+00 : f32
    %42 = vector.broadcast %cst_24 : f32 to vector<8x56xf32>
    %43 = arith.cmpf ogt, %41, %42 : vector<8x56xf32>
    %cst_25 = arith.constant 0.00999999977 : f32
    %44 = vector.broadcast %cst_25 : f32 to vector<8x56xf32>
    %45 = arith.mulf %44, %41 : vector<8x56xf32>
    %46 = arith.select %43, %41, %45 : vector<8x56xi1>, vector<8x56xf32>
    %47 = arith.truncf %46 : vector<8x56xf32> to vector<8x56xbf16>
    %c1_26 = arith.constant 1 : index
    %c0_27 = arith.constant 0 : index
    %c0_28 = arith.constant 0 : index
    %48 = vector.load %arg5[%c1_26, %c0_27, %c0_28] : memref<7x56x32xbf16, #tpu.memory_space<vmem>>, vector<1x56x32xbf16>
    %49 = vector.shape_cast %48 : vector<1x56x32xbf16> to vector<56x32xbf16>
    %cst_29 = arith.constant dense<0.000000e+00> : vector<8x32xf32>
    %50 = tpu.matmul %47, %49, %cst_29 {dimension_numbers = #tpu.dot_dimension_numbers<[1], [0], [0], [1], [0, 0, 1, 1], [], []>} : vector<8x56xbf16>, vector<56x32xbf16>, vector<8x32xf32> -> vector<8x32xf32>
    %51 = arith.addf %29, %50 : vector<8x32xf32>
    %c0_30 = arith.constant 0 : index
    %c2 = arith.constant 2 : index
    %c0_31 = arith.constant 0 : index
    %c0_32 = arith.constant 0 : index
    %52 = vector.load %arg1[%c0_30, %c2, %c0_31, %c0_32] : memref<1x7x32x252xbf16, #tpu.memory_space<vmem>>, vector<1x1x32x252xbf16>
    %53 = vector.shape_cast %52 : vector<1x1x32x252xbf16> to vector<32x252xbf16>
    %cst_33 = arith.constant dense<0.000000e+00> : vector<32x56xf32>
    %54 = tpu.matmul %53, %0, %cst_33 {dimension_numbers = #tpu.dot_dimension_numbers<[1], [0], [0], [1], [0, 0, 1, 1], [], []>} : vector<32x252xbf16>, vector<252x56xbf16>, vector<32x56xf32> -> vector<32x56xf32>
    %55 = vector.extract_strided_slice %54 {offsets = [0, 0], sizes = [8, 56], strides = [1, 1]} : vector<32x56xf32> to vector<8x56xf32>
    %56 = vector.extract_strided_slice %54 {offsets = [8, 0], sizes = [8, 56], strides = [1, 1]} : vector<32x56xf32> to vector<8x56xf32>
    %57 = arith.maximumf %55, %56 : vector<8x56xf32>
    %58 = vector.extract_strided_slice %54 {offsets = [16, 0], sizes = [8, 56], strides = [1, 1]} : vector<32x56xf32> to vector<8x56xf32>
    %59 = vector.extract_strided_slice %54 {offsets = [24, 0], sizes = [8, 56], strides = [1, 1]} : vector<32x56xf32> to vector<8x56xf32>
    %60 = arith.maximumf %58, %59 : vector<8x56xf32>
    %61 = arith.maximumf %57, %60 : vector<8x56xf32>
    %62 = vector.broadcast %1 : vector<1x56xf32> to vector<8x56xf32>
    %63 = arith.addf %61, %62 : vector<8x56xf32>
    %cst_34 = arith.constant 0.000000e+00 : f32
    %64 = vector.broadcast %cst_34 : f32 to vector<8x56xf32>
    %65 = arith.cmpf ogt, %63, %64 : vector<8x56xf32>
    %cst_35 = arith.constant 0.00999999977 : f32
    %66 = vector.broadcast %cst_35 : f32 to vector<8x56xf32>
    %67 = arith.mulf %66, %63 : vector<8x56xf32>
    %68 = arith.select %65, %63, %67 : vector<8x56xi1>, vector<8x56xf32>
    %69 = arith.truncf %68 : vector<8x56xf32> to vector<8x56xbf16>
    %c2_36 = arith.constant 2 : index
    %c0_37 = arith.constant 0 : index
    %c0_38 = arith.constant 0 : index
    %70 = vector.load %arg5[%c2_36, %c0_37, %c0_38] : memref<7x56x32xbf16, #tpu.memory_space<vmem>>, vector<1x56x32xbf16>
    %71 = vector.shape_cast %70 : vector<1x56x32xbf16> to vector<56x32xbf16>
    %cst_39 = arith.constant dense<0.000000e+00> : vector<8x32xf32>
    %72 = tpu.matmul %69, %71, %cst_39 {dimension_numbers = #tpu.dot_dimension_numbers<[1], [0], [0], [1], [0, 0, 1, 1], [], []>} : vector<8x56xbf16>, vector<56x32xbf16>, vector<8x32xf32> -> vector<8x32xf32>
    %73 = arith.addf %51, %72 : vector<8x32xf32>
    %c0_40 = arith.constant 0 : index
    %c3 = arith.constant 3 : index
    %c0_41 = arith.constant 0 : index
    %c0_42 = arith.constant 0 : index
    %74 = vector.load %arg1[%c0_40, %c3, %c0_41, %c0_42] : memref<1x7x32x252xbf16, #tpu.memory_space<vmem>>, vector<1x1x32x252xbf16>
    %75 = vector.shape_cast %74 : vector<1x1x32x252xbf16> to vector<32x252xbf16>
    %cst_43 = arith.constant dense<0.000000e+00> : vector<32x56xf32>
    %76 = tpu.matmul %75, %0, %cst_43 {dimension_numbers = #tpu.dot_dimension_numbers<[1], [0], [0], [1], [0, 0, 1, 1], [], []>} : vector<32x252xbf16>, vector<252x56xbf16>, vector<32x56xf32> -> vector<32x56xf32>
    %77 = vector.extract_strided_slice %76 {offsets = [0, 0], sizes = [8, 56], strides = [1, 1]} : vector<32x56xf32> to vector<8x56xf32>
    %78 = vector.extract_strided_slice %76 {offsets = [8, 0], sizes = [8, 56], strides = [1, 1]} : vector<32x56xf32> to vector<8x56xf32>
    %79 = arith.maximumf %77, %78 : vector<8x56xf32>
    %80 = vector.extract_strided_slice %76 {offsets = [16, 0], sizes = [8, 56], strides = [1, 1]} : vector<32x56xf32> to vector<8x56xf32>
    %81 = vector.extract_strided_slice %76 {offsets = [24, 0], sizes = [8, 56], strides = [1, 1]} : vector<32x56xf32> to vector<8x56xf32>
    %82 = arith.maximumf %80, %81 : vector<8x56xf32>
    %83 = arith.maximumf %79, %82 : vector<8x56xf32>
    %84 = vector.broadcast %1 : vector<1x56xf32> to vector<8x56xf32>
    %85 = arith.addf %83, %84 : vector<8x56xf32>
    %cst_44 = arith.constant 0.000000e+00 : f32
    %86 = vector.broadcast %cst_44 : f32 to vector<8x56xf32>
    %87 = arith.cmpf ogt, %85, %86 : vector<8x56xf32>
    %cst_45 = arith.constant 0.00999999977 : f32
    %88 = vector.broadcast %cst_45 : f32 to vector<8x56xf32>
    %89 = arith.mulf %88, %85 : vector<8x56xf32>
    %90 = arith.select %87, %85, %89 : vector<8x56xi1>, vector<8x56xf32>
    %91 = arith.truncf %90 : vector<8x56xf32> to vector<8x56xbf16>
    %c3_46 = arith.constant 3 : index
    %c0_47 = arith.constant 0 : index
    %c0_48 = arith.constant 0 : index
    %92 = vector.load %arg5[%c3_46, %c0_47, %c0_48] : memref<7x56x32xbf16, #tpu.memory_space<vmem>>, vector<1x56x32xbf16>
    %93 = vector.shape_cast %92 : vector<1x56x32xbf16> to vector<56x32xbf16>
    %cst_49 = arith.constant dense<0.000000e+00> : vector<8x32xf32>
    %94 = tpu.matmul %91, %93, %cst_49 {dimension_numbers = #tpu.dot_dimension_numbers<[1], [0], [0], [1], [0, 0, 1, 1], [], []>} : vector<8x56xbf16>, vector<56x32xbf16>, vector<8x32xf32> -> vector<8x32xf32>
    %95 = arith.addf %73, %94 : vector<8x32xf32>
    %c0_50 = arith.constant 0 : index
    %c4 = arith.constant 4 : index
    %c0_51 = arith.constant 0 : index
    %c0_52 = arith.constant 0 : index
    %96 = vector.load %arg1[%c0_50, %c4, %c0_51, %c0_52] : memref<1x7x32x252xbf16, #tpu.memory_space<vmem>>, vector<1x1x32x252xbf16>
    %97 = vector.shape_cast %96 : vector<1x1x32x252xbf16> to vector<32x252xbf16>
    %cst_53 = arith.constant dense<0.000000e+00> : vector<32x56xf32>
    %98 = tpu.matmul %97, %0, %cst_53 {dimension_numbers = #tpu.dot_dimension_numbers<[1], [0], [0], [1], [0, 0, 1, 1], [], []>} : vector<32x252xbf16>, vector<252x56xbf16>, vector<32x56xf32> -> vector<32x56xf32>
    %99 = vector.extract_strided_slice %98 {offsets = [0, 0], sizes = [8, 56], strides = [1, 1]} : vector<32x56xf32> to vector<8x56xf32>
    %100 = vector.extract_strided_slice %98 {offsets = [8, 0], sizes = [8, 56], strides = [1, 1]} : vector<32x56xf32> to vector<8x56xf32>
    %101 = arith.maximumf %99, %100 : vector<8x56xf32>
    %102 = vector.extract_strided_slice %98 {offsets = [16, 0], sizes = [8, 56], strides = [1, 1]} : vector<32x56xf32> to vector<8x56xf32>
    %103 = vector.extract_strided_slice %98 {offsets = [24, 0], sizes = [8, 56], strides = [1, 1]} : vector<32x56xf32> to vector<8x56xf32>
    %104 = arith.maximumf %102, %103 : vector<8x56xf32>
    %105 = arith.maximumf %101, %104 : vector<8x56xf32>
    %106 = vector.broadcast %1 : vector<1x56xf32> to vector<8x56xf32>
    %107 = arith.addf %105, %106 : vector<8x56xf32>
    %cst_54 = arith.constant 0.000000e+00 : f32
    %108 = vector.broadcast %cst_54 : f32 to vector<8x56xf32>
    %109 = arith.cmpf ogt, %107, %108 : vector<8x56xf32>
    %cst_55 = arith.constant 0.00999999977 : f32
    %110 = vector.broadcast %cst_55 : f32 to vector<8x56xf32>
    %111 = arith.mulf %110, %107 : vector<8x56xf32>
    %112 = arith.select %109, %107, %111 : vector<8x56xi1>, vector<8x56xf32>
    %113 = arith.truncf %112 : vector<8x56xf32> to vector<8x56xbf16>
    %c4_56 = arith.constant 4 : index
    %c0_57 = arith.constant 0 : index
    %c0_58 = arith.constant 0 : index
    %114 = vector.load %arg5[%c4_56, %c0_57, %c0_58] : memref<7x56x32xbf16, #tpu.memory_space<vmem>>, vector<1x56x32xbf16>
    %115 = vector.shape_cast %114 : vector<1x56x32xbf16> to vector<56x32xbf16>
    %cst_59 = arith.constant dense<0.000000e+00> : vector<8x32xf32>
    %116 = tpu.matmul %113, %115, %cst_59 {dimension_numbers = #tpu.dot_dimension_numbers<[1], [0], [0], [1], [0, 0, 1, 1], [], []>} : vector<8x56xbf16>, vector<56x32xbf16>, vector<8x32xf32> -> vector<8x32xf32>
    %117 = arith.addf %95, %116 : vector<8x32xf32>
    %c0_60 = arith.constant 0 : index
    %c5 = arith.constant 5 : index
    %c0_61 = arith.constant 0 : index
    %c0_62 = arith.constant 0 : index
    %118 = vector.load %arg1[%c0_60, %c5, %c0_61, %c0_62] : memref<1x7x32x252xbf16, #tpu.memory_space<vmem>>, vector<1x1x32x252xbf16>
    %119 = vector.shape_cast %118 : vector<1x1x32x252xbf16> to vector<32x252xbf16>
    %cst_63 = arith.constant dense<0.000000e+00> : vector<32x56xf32>
    %120 = tpu.matmul %119, %0, %cst_63 {dimension_numbers = #tpu.dot_dimension_numbers<[1], [0], [0], [1], [0, 0, 1, 1], [], []>} : vector<32x252xbf16>, vector<252x56xbf16>, vector<32x56xf32> -> vector<32x56xf32>
    %121 = vector.extract_strided_slice %120 {offsets = [0, 0], sizes = [8, 56], strides = [1, 1]} : vector<32x56xf32> to vector<8x56xf32>
    %122 = vector.extract_strided_slice %120 {offsets = [8, 0], sizes = [8, 56], strides = [1, 1]} : vector<32x56xf32> to vector<8x56xf32>
    %123 = arith.maximumf %121, %122 : vector<8x56xf32>
    %124 = vector.extract_strided_slice %120 {offsets = [16, 0], sizes = [8, 56], strides = [1, 1]} : vector<32x56xf32> to vector<8x56xf32>
    %125 = vector.extract_strided_slice %120 {offsets = [24, 0], sizes = [8, 56], strides = [1, 1]} : vector<32x56xf32> to vector<8x56xf32>
    %126 = arith.maximumf %124, %125 : vector<8x56xf32>
    %127 = arith.maximumf %123, %126 : vector<8x56xf32>
    %128 = vector.broadcast %1 : vector<1x56xf32> to vector<8x56xf32>
    %129 = arith.addf %127, %128 : vector<8x56xf32>
    %cst_64 = arith.constant 0.000000e+00 : f32
    %130 = vector.broadcast %cst_64 : f32 to vector<8x56xf32>
    %131 = arith.cmpf ogt, %129, %130 : vector<8x56xf32>
    %cst_65 = arith.constant 0.00999999977 : f32
    %132 = vector.broadcast %cst_65 : f32 to vector<8x56xf32>
    %133 = arith.mulf %132, %129 : vector<8x56xf32>
    %134 = arith.select %131, %129, %133 : vector<8x56xi1>, vector<8x56xf32>
    %135 = arith.truncf %134 : vector<8x56xf32> to vector<8x56xbf16>
    %c5_66 = arith.constant 5 : index
    %c0_67 = arith.constant 0 : index
    %c0_68 = arith.constant 0 : index
    %136 = vector.load %arg5[%c5_66, %c0_67, %c0_68] : memref<7x56x32xbf16, #tpu.memory_space<vmem>>, vector<1x56x32xbf16>
    %137 = vector.shape_cast %136 : vector<1x56x32xbf16> to vector<56x32xbf16>
    %cst_69 = arith.constant dense<0.000000e+00> : vector<8x32xf32>
    %138 = tpu.matmul %135, %137, %cst_69 {dimension_numbers = #tpu.dot_dimension_numbers<[1], [0], [0], [1], [0, 0, 1, 1], [], []>} : vector<8x56xbf16>, vector<56x32xbf16>, vector<8x32xf32> -> vector<8x32xf32>
    %139 = arith.addf %117, %138 : vector<8x32xf32>
    %c0_70 = arith.constant 0 : index
    %c6 = arith.constant 6 : index
    %c0_71 = arith.constant 0 : index
    %c0_72 = arith.constant 0 : index
    %140 = vector.load %arg1[%c0_70, %c6, %c0_71, %c0_72] : memref<1x7x32x252xbf16, #tpu.memory_space<vmem>>, vector<1x1x32x252xbf16>
    %141 = vector.shape_cast %140 : vector<1x1x32x252xbf16> to vector<32x252xbf16>
    %cst_73 = arith.constant dense<0.000000e+00> : vector<32x56xf32>
    %142 = tpu.matmul %141, %0, %cst_73 {dimension_numbers = #tpu.dot_dimension_numbers<[1], [0], [0], [1], [0, 0, 1, 1], [], []>} : vector<32x252xbf16>, vector<252x56xbf16>, vector<32x56xf32> -> vector<32x56xf32>
    %143 = vector.extract_strided_slice %142 {offsets = [0, 0], sizes = [8, 56], strides = [1, 1]} : vector<32x56xf32> to vector<8x56xf32>
    %144 = vector.extract_strided_slice %142 {offsets = [8, 0], sizes = [8, 56], strides = [1, 1]} : vector<32x56xf32> to vector<8x56xf32>
    %145 = arith.maximumf %143, %144 : vector<8x56xf32>
    %146 = vector.extract_strided_slice %142 {offsets = [16, 0], sizes = [8, 56], strides = [1, 1]} : vector<32x56xf32> to vector<8x56xf32>
    %147 = vector.extract_strided_slice %142 {offsets = [24, 0], sizes = [8, 56], strides = [1, 1]} : vector<32x56xf32> to vector<8x56xf32>
    %148 = arith.maximumf %146, %147 : vector<8x56xf32>
    %149 = arith.maximumf %145, %148 : vector<8x56xf32>
    %150 = vector.broadcast %1 : vector<1x56xf32> to vector<8x56xf32>
    %151 = arith.addf %149, %150 : vector<8x56xf32>
    %cst_74 = arith.constant 0.000000e+00 : f32
    %152 = vector.broadcast %cst_74 : f32 to vector<8x56xf32>
    %153 = arith.cmpf ogt, %151, %152 : vector<8x56xf32>
    %cst_75 = arith.constant 0.00999999977 : f32
    %154 = vector.broadcast %cst_75 : f32 to vector<8x56xf32>
    %155 = arith.mulf %154, %151 : vector<8x56xf32>
    %156 = arith.select %153, %151, %155 : vector<8x56xi1>, vector<8x56xf32>
    %157 = arith.truncf %156 : vector<8x56xf32> to vector<8x56xbf16>
    %c6_76 = arith.constant 6 : index
    %c0_77 = arith.constant 0 : index
    %c0_78 = arith.constant 0 : index
    %158 = vector.load %arg5[%c6_76, %c0_77, %c0_78] : memref<7x56x32xbf16, #tpu.memory_space<vmem>>, vector<1x56x32xbf16>
    %159 = vector.shape_cast %158 : vector<1x56x32xbf16> to vector<56x32xbf16>
    %cst_79 = arith.constant dense<0.000000e+00> : vector<8x32xf32>
    %160 = tpu.matmul %157, %159, %cst_79 {dimension_numbers = #tpu.dot_dimension_numbers<[1], [0], [0], [1], [0, 0, 1, 1], [], []>} : vector<8x56xbf16>, vector<56x32xbf16>, vector<8x32xf32> -> vector<8x32xf32>
    %161 = arith.addf %139, %160 : vector<8x32xf32>
    %cst_80 = arith.constant 0.000000e+00 : f32
    %162 = vector.broadcast %cst_80 : f32 to vector<8x32xf32>
    %163 = arith.cmpf ogt, %161, %162 : vector<8x32xf32>
    %cst_81 = arith.constant 0.00999999977 : f32
    %164 = vector.broadcast %cst_81 : f32 to vector<8x32xf32>
    %165 = arith.mulf %164, %161 : vector<8x32xf32>
    %166 = arith.select %163, %161, %165 : vector<8x32xi1>, vector<8x32xf32>
    %167 = arith.truncf %166 : vector<8x32xf32> to vector<8x32xbf16>
    %c0_82 = arith.constant 0 : index
    %c0_83 = arith.constant 0 : index
    %168 = vector.load %arg8[%c0_82, %c0_83] : memref<32x16xbf16, #tpu.memory_space<vmem>>, vector<32x16xbf16>
    %cst_84 = arith.constant dense<0.000000e+00> : vector<8x16xf32>
    %169 = tpu.matmul %167, %168, %cst_84 {dimension_numbers = #tpu.dot_dimension_numbers<[1], [0], [0], [1], [0, 0, 1, 1], [], []>} : vector<8x32xbf16>, vector<32x16xbf16>, vector<8x16xf32> -> vector<8x16xf32>
    %c0_85 = arith.constant 0 : index
    %c0_86 = arith.constant 0 : index
    %170 = vector.load %arg9[%c0_85, %c0_86] : memref<1x16xf32, #tpu.memory_space<vmem>>, vector<1x16xf32>
    %171 = vector.broadcast %170 : vector<1x16xf32> to vector<8x16xf32>
    %172 = arith.addf %169, %171 : vector<8x16xf32>
    %cst_87 = arith.constant 0.000000e+00 : f32
    %173 = vector.broadcast %cst_87 : f32 to vector<8x16xf32>
    %174 = arith.cmpf ogt, %172, %173 : vector<8x16xf32>
    %cst_88 = arith.constant 0.00999999977 : f32
    %175 = vector.broadcast %cst_88 : f32 to vector<8x16xf32>
    %176 = arith.mulf %175, %172 : vector<8x16xf32>
    %177 = arith.select %174, %172, %176 : vector<8x16xi1>, vector<8x16xf32>
    %178 = arith.truncf %177 : vector<8x16xf32> to vector<8x16xbf16>
    %c0_89 = arith.constant 0 : index
    %c0_90 = arith.constant 0 : index
    %179 = vector.load %arg10[%c0_89, %c0_90] : memref<16x6xbf16, #tpu.memory_space<vmem>>, vector<16x6xbf16>
    %cst_91 = arith.constant dense<0.000000e+00> : vector<8x6xf32>
    %180 = tpu.matmul %178, %179, %cst_91 {dimension_numbers = #tpu.dot_dimension_numbers<[1], [0], [0], [1], [0, 0, 1, 1], [], []>} : vector<8x16xbf16>, vector<16x6xbf16>, vector<8x6xf32> -> vector<8x6xf32>
    %c0_92 = arith.constant 0 : index
    %c0_93 = arith.constant 0 : index
    %181 = vector.load %arg11[%c0_92, %c0_93] : memref<1x6xf32, #tpu.memory_space<vmem>>, vector<1x6xf32>
    %182 = vector.broadcast %181 : vector<1x6xf32> to vector<8x6xf32>
    %183 = arith.addf %180, %182 : vector<8x6xf32>
    %c0_94 = arith.constant 0 : index
    %c0_95 = arith.constant 0 : index
    %184 = vector.load %arg12[%c0_94, %c0_95] : memref<8x6xf32, #tpu.memory_space<vmem>>, vector<8x6xf32>
    tpu.vector_store %arg12[%c0_94, %c0_95], %183 {strides = array<i32>} : memref<8x6xf32, #tpu.memory_space<vmem>>, vector<8x6xf32>,
    return
  }
  func.func @transform_0(%arg0: i32) -> (i32, i32, i32, i32) {
    %c0_i32 = arith.constant 0 : i32
    %c0_i32_0 = arith.constant 0 : i32
    %c0_i32_1 = arith.constant 0 : i32
    %c0_i32_2 = arith.constant 0 : i32
    return %arg0, %c0_i32, %c0_i32_0, %c0_i32_1 : i32, i32, i32, i32
  }
  func.func @transform_1(%arg0: i32) -> (i32, i32) {
    %c0_i32 = arith.constant 0 : i32
    %c0_i32_0 = arith.constant 0 : i32
    return %arg0, %c0_i32 : i32, i32
  }
  func.func @transform_2(%arg0: i32) -> (i32, i32) {
    %c0_i32 = arith.constant 0 : i32
    %c0_i32_0 = arith.constant 0 : i32
    %c0_i32_1 = arith.constant 0 : i32
    return %c0_i32, %c0_i32_0 : i32, i32
  }
  func.func @transform_3(%arg0: i32) -> (i32, i32) {
    %c0_i32 = arith.constant 0 : i32
    %c0_i32_0 = arith.constant 0 : i32
    %c0_i32_1 = arith.constant 0 : i32
    return %c0_i32, %c0_i32_0 : i32, i32
  }
  func.func @transform_4(%arg0: i32) -> (i32, i32, i32) {
    %c0_i32 = arith.constant 0 : i32
    %c0_i32_0 = arith.constant 0 : i32
    %c0_i32_1 = arith.constant 0 : i32
    %c0_i32_2 = arith.constant 0 : i32
    return %c0_i32, %c0_i32_0, %c0_i32_1 : i32, i32, i32
  }
  func.func @transform_5(%arg0: i32) -> (i32, i32) {
    %c0_i32 = arith.constant 0 : i32
    %c0_i32_0 = arith.constant 0 : i32
    %c0_i32_1 = arith.constant 0 : i32
    return %c0_i32, %c0_i32_0 : i32, i32
  }
  func.func @transform_6(%arg0: i32) -> (i32, i32) {
    %c0_i32 = arith.constant 0 : i32
    %c0_i32_0 = arith.constant 0 : i32
    %c0_i32_1 = arith.constant 0 : i32
    return %c0_i32, %c0_i32_0 : i32, i32
  }
  func.func @transform_7(%arg0: i32) -> (i32, i32) {
    %c0_i32 = arith.constant 0 : i32
    %c0_i32_0 = arith.constant 0 : i32
    %c0_i32_1 = arith.constant 0 : i32
    return %c0_i32, %c0_i32_0 : i32, i32
  }
  func.func @transform_8(%arg0: i32) -> (i32, i32) {
    %c0_i32 = arith.constant 0 : i32
    %c0_i32_0 = arith.constant 0 : i32
    %c0_i32_1 = arith.constant 0 : i32
    return %c0_i32, %c0_i32_0 : i32, i32
  }
  func.func @transform_9(%arg0: i32) -> (i32, i32) {
    %c0_i32 = arith.constant 0 : i32
    %c0_i32_0 = arith.constant 0 : i32
    %c0_i32_1 = arith.constant 0 : i32
    return %c0_i32, %c0_i32_0 : i32, i32
  }
  func.func @transform_10(%arg0: i32) -> (i32, i32) {
    %c0_i32 = arith.constant 0 : i32
    %c0_i32_0 = arith.constant 0 : i32
    %c0_i32_1 = arith.constant 0 : i32
    return %c0_i32, %c0_i32_0 : i32, i32
  }
  func.func @transform_11(%arg0: i32) -> (i32, i32) {
    %c0_i32 = arith.constant 0 : i32
    %c0_i32_0 = arith.constant 0 : i32
    return %arg0, %c0_i32 : i32, i32
  }
}

</mosaic_0001>

<llo_original>
// kernel: policy_forward.1
$region0: #{policy_forward.1}
  #allocation0 [shape = 'u32[]', space=smem, size = 0x4, offset = 0x4, fixed_abs, tag = 'smem constant byte address 0x4 - core index']
  #allocation1 [shape = 'u32[144,128]{1,0:T(1,128)}', space=vmem, size = 0x12000, scoped, tag = 'internal scratch']
  %s0 = inlined_call_operand.vmem [shape: bf16[1,7,32,252], index: 0, kind: input, shape index: {}]
  %s1 = inlined_call_operand.vmem [shape: bf16[8,8], index: 1, kind: input, shape index: {}]
  %s2 = inlined_call_operand.vmem [shape: bf16[252,56], index: 2, kind: input, shape index: {}]
  %s3 = inlined_call_operand.vmem [shape: f32[1,56], index: 3, kind: input, shape index: {}]
  %s4 = inlined_call_operand.vmem [shape: bf16[7,56,32], index: 4, kind: input, shape index: {}]
  %s5 = inlined_call_operand.vmem [shape: bf16[8,32], index: 5, kind: input, shape index: {}]
  %s6 = inlined_call_operand.vmem [shape: f32[1,32], index: 6, kind: input, shape index: {}]
  %s7 = inlined_call_operand.vmem [shape: bf16[32,16], index: 7, kind: input, shape index: {}]
  %s8 = inlined_call_operand.vmem [shape: f32[1,16], index: 8, kind: input, shape index: {}]
  %s9 = inlined_call_operand.vmem [shape: bf16[16,6], index: 9, kind: input, shape index: {}]
  %s10 = inlined_call_operand.vmem [shape: f32[1,6], index: 10, kind: input, shape index: {}]
  %s11 = inlined_call_operand.vmem [shape: f32[8,6], index: 11, kind: output, shape index: {}]
  %s12 = sld [smem:[#allocation0]]
  $region54: #{policy_forward.1} parent=0
    _
  %s14 = ssub.s32 1, %s12
  %s15 = scalar_select 0, %s14, %s12
  // Predicated region
  $region2: #{policy_forward.1} parent=0 // pred_check
    _
  $region3: #{policy_forward.1} parent=0 // pred_check_branch
    %17 = sbr.rel (0) target = $region5
  $region4: #{policy_forward.1} parent=0 // pred_region
    _
  $region5: #{policy_forward.1} parent=0 // pred_fallthru
    _
  // Predicated region
  $region6: #{policy_forward.1} parent=0 // pred_check
    _
  $region7: #{policy_forward.1} parent=0 // pred_check_branch
    %19 = sbr.rel (0) target = $region9
  $region8: #{policy_forward.1} parent=0 // pred_region
    _
  $region9: #{policy_forward.1} parent=0 // pred_fallthru
    _
  // Predicated region
  $region10: #{policy_forward.1} parent=0 // pred_check
    _
  $region11: #{policy_forward.1} parent=0 // pred_check_branch
    %21 = sbr.rel (0) target = $region13
  $region12: #{policy_forward.1} parent=0 // pred_region
    _
  $region13: #{policy_forward.1} parent=0 // pred_fallthru
    _
  // Predicated region
  $region14: #{policy_forward.1} parent=0 // pred_check
    _
  $region15: #{policy_forward.1} parent=0 // pred_check_branch
    %23 = sbr.rel (0) target = $region17
  $region16: #{policy_forward.1} parent=0 // pred_region
    _
  $region17: #{policy_forward.1} parent=0 // pred_fallthru
    _
  // Predicated region
  $region18: #{policy_forward.1} parent=0 // pred_check
    _
  $region19: #{policy_forward.1} parent=0 // pred_check_branch
    %25 = sbr.rel (0) target = $region21
  $region20: #{policy_forward.1} parent=0 // pred_region
    _
  $region21: #{policy_forward.1} parent=0 // pred_fallthru
    _
  // Predicated region
  $region22: #{policy_forward.1} parent=0 // pred_check
    _
  $region23: #{policy_forward.1} parent=0 // pred_check_branch
    %27 = sbr.rel (0) target = $region25
  $region24: #{policy_forward.1} parent=0 // pred_region
    _
  $region25: #{policy_forward.1} parent=0 // pred_fallthru
    _
  // Predicated region
  $region26: #{policy_forward.1} parent=0 // pred_check
    _
  $region27: #{policy_forward.1} parent=0 // pred_check_branch
    %29 = sbr.rel (0) target = $region29
  $region28: #{policy_forward.1} parent=0 // pred_region
    _
  $region29: #{policy_forward.1} parent=0 // pred_fallthru
    _
  // Predicated region
  $region30: #{policy_forward.1} parent=0 // pred_check
    _
  $region31: #{policy_forward.1} parent=0 // pred_check_branch
    %31 = sbr.rel (0) target = $region33
  $region32: #{policy_forward.1} parent=0 // pred_region
    _
  $region33: #{policy_forward.1} parent=0 // pred_fallthru
    _
  // Predicated region
  $region34: #{policy_forward.1} parent=0 // pred_check
    _
  $region35: #{policy_forward.1} parent=0 // pred_check_branch
    %33 = sbr.rel (0) target = $region37
  $region36: #{policy_forward.1} parent=0 // pred_region
    _
  $region37: #{policy_forward.1} parent=0 // pred_fallthru
    _
  // Predicated region
  $region38: #{policy_forward.1} parent=0 // pred_check
    _
  $region39: #{policy_forward.1} parent=0 // pred_check_branch
    %35 = sbr.rel (0) target = $region41
  $region40: #{policy_forward.1} parent=0 // pred_region
    _
  $region41: #{policy_forward.1} parent=0 // pred_fallthru
    _
  // Predicated region
  $region42: #{policy_forward.1} parent=0 // pred_check
    _
  $region43: #{policy_forward.1} parent=0 // pred_check_branch
    %37 = sbr.rel (0) target = $region45
  $region44: #{policy_forward.1} parent=0 // pred_region
    _
  $region45: #{policy_forward.1} parent=0 // pred_fallthru
    _
  %v39 = vld [vmem:[%s2] sm:$0xf]
  %v40 = vld [vmem:[%s2 + $0x4] sm:$0xf]
  %v41 = vld [vmem:[%s2 + $0x8] sm:$0xf]
  %v42 = vld [vmem:[%s2 + $0xc] sm:$0xf]
  %v43 = vld [vmem:[%s2 + $0x10] sm:$0xf]
  %v44 = vld [vmem:[%s2 + $0x14] sm:$0xf]
  %v45 = vld [vmem:[%s2 + $0x18] sm:$0xf]
  %v46 = vld [vmem:[%s2 + $0x1c] sm:$0xf]
  %v47 = vld [vmem:[%s2 + $0x20] sm:$0xf]
  %v48 = vld [vmem:[%s2 + $0x24] sm:$0xf]
  %v49 = vld [vmem:[%s2 + $0x28] sm:$0xf]
  %v50 = vld [vmem:[%s2 + $0x2c] sm:$0xf]
  %v51 = vld [vmem:[%s2 + $0x30] sm:$0xf]
  %v52 = vld [vmem:[%s2 + $0x34] sm:$0xf]
  %v53 = vld [vmem:[%s2 + $0x38] sm:$0xf]
  %v54 = vld [vmem:[%s2 + $0x3c] sm:$0xf]
  %v55 = vld [vmem:[%s2 + $0x40] sm:$0xf]
  %v56 = vld [vmem:[%s2 + $0x44] sm:$0xf]
  %v57 = vld [vmem:[%s2 + $0x48] sm:$0xf]
  %v58 = vld [vmem:[%s2 + $0x4c] sm:$0xf]
  %v59 = vld [vmem:[%s2 + $0x50] sm:$0xf]
  %v60 = vld [vmem:[%s2 + $0x54] sm:$0xf]
  %v61 = vld [vmem:[%s2 + $0x58] sm:$0xf]
  %v62 = vld [vmem:[%s2 + $0x5c] sm:$0xf]
  %v63 = vld [vmem:[%s2 + $0x60] sm:$0xf]
  %v64 = vld [vmem:[%s2 + $0x64] sm:$0xf]
  %v65 = vld [vmem:[%s2 + $0x68] sm:$0xf]
  %v66 = vld [vmem:[%s2 + $0x6c] sm:$0xf]
  %v67 = vld [vmem:[%s2 + $0x70] sm:$0xf]
  %v68 = vld [vmem:[%s2 + $0x74] sm:$0xf]
  %v69 = vld [vmem:[%s2 + $0x78] sm:$0xf]
  %v70 = vld [vmem:[%s2 + $0x7c] sm:$0x3]
  %v71 = vld [vmem:[%s3] sm:$0x1]
  %v72 = vld [vmem:[%s1] sm:$0xf]
  %v73 = vld [vmem:[%s5] sm:$0xf]
  %v74 = vld [vmem:[%s6] sm:$0x1]
  %v76 = vlaneseq
  %v77 = vshrl.u32 %v76, 7
  %v78 = vsub.s32 0, %v77
  %v79 = vrot.slane %v74, %v78
  %vm81 = vcmask 64512
  %v83 = vsel %vm81, %v72, 0
  %vm85 = vcmask 1043456
  %v87 = vsel %vm85, %v73, 0
  %89 = vmatprep.subr.bf16.mxu0 0
  %90 = vmatpush1.bf16.msra.mxu0 0
  %91 = vmatprep.subr.bf16.mxu0 0
  %92 = vmatpush1.bf16.msra.mxu0 0
  %93 = vmatprep.subr.bf16.mxu0 0
  %94 = vmatpush1.bf16.msra.mxu0 0
  %95 = vmatprep.subr.bf16.mxu0 0
  %96 = vmatpush1.bf16.msra.mxu0 0
  %97 = vmatprep.subr.bf16.mxu0 0
  %98 = vmatpush1.bf16.msra.mxu0 0
  %99 = vmatprep.subr.bf16.mxu0 0
  %100 = vmatpush1.bf16.msra.mxu0 0
  %101 = vmatprep.subr.bf16.mxu0 0
  %102 = vmatpush1.bf16.msra.mxu0 0
  %103 = vmatprep.subr.bf16.mxu0 0
  %104 = vmatpush1.bf16.msra.mxu0 %v87
  %105 = vmatprep.subr.bf16.mxu0 0
  %106 = vmatpush2.bf16.msra.mxu0 0
  %107 = vmatprep.subr.bf16.mxu0 0
  %108 = vmatpush2.bf16.msra.mxu0 0
  %109 = vmatprep.subr.bf16.mxu0 0
  %110 = vmatpush2.bf16.msra.mxu0 0
  %111 = vmatprep.subr.bf16.mxu0 0
  %112 = vmatpush2.bf16.msra.mxu0 0
  %113 = vmatprep.subr.bf16.mxu0 0
  %114 = vmatpush2.bf16.msra.mxu0 0
  %115 = vmatprep.subr.bf16.mxu0 0
  %116 = vmatpush2.bf16.msra.mxu0 0
  %117 = vmatprep.subr.bf16.mxu0 0
  %118 = vmatpush2.bf16.msra.mxu0 0
  %119 = vmatprep.subr.bf16.mxu0 0
  %120 = vmatpush2.bf16.msra.mxu0 0
  %121 = vmatprep.mubr.bf16.mxu0 0
  %122 = vmatmul.mubr.bf16.gmra.mxu0 %v83
  %v123 = vpop.f32.mrf.mxu0
  %v124 = vadd.f32 %v79, %v123
  %v125 = vpop.f32.mrf.mxu0
  %v126 = vpop.f32.mrf.mxu0
  %v127 = vpop.f32.mrf.mxu0
  %128 = vdwg.mxu0
  %v129 = vld [vmem:[%s0] sm:$0xff]
  %v130 = vld [vmem:[%s0 + $0x8] sm:$0xff]
  %v131 = vld [vmem:[%s0 + $0x10] sm:$0xff]
  %v132 = vld [vmem:[%s0 + $0x18] sm:$0xff]
  %v137 = vunpack.c.l.b16 %v129
  %v138 = vunpack.c.h.b16 %v129
  %v139 = vunpack.c.l.b16 %v130
  %v140 = vunpack.c.h.b16 %v130
  %v141 = vunpack.c.l.b16 %v131
  %v142 = vunpack.c.h.b16 %v131
  %v143 = vunpack.c.l.b16 %v132
  %v144 = vunpack.c.h.b16 %v132
  %v145 = vpack.c.b16 %v139, %v137
  %v146 = vpack.c.b16 %v140, %v138
  %v147 = vpack.c.b16 %v143, %v141
  %v148 = vpack.c.b16 %v144, %v142
  %v183 = vunpack.c.l.b16 %v39
  %v184 = vunpack.c.l.b16 %v40
  %v185 = vunpack.c.l.b16 %v41
  %v186 = vunpack.c.l.b16 %v42
  %v187 = vunpack.c.l.b16 %v43
  %v188 = vunpack.c.l.b16 %v44
  %v189 = vunpack.c.l.b16 %v45
  %v190 = vunpack.c.l.b16 %v46
  %v191 = vunpack.c.l.b16 %v47
  %v192 = vunpack.c.l.b16 %v48
  %v193 = vunpack.c.l.b16 %v49
  %v194 = vunpack.c.l.b16 %v50
  %v195 = vunpack.c.l.b16 %v51
  %v196 = vunpack.c.l.b16 %v52
  %v197 = vunpack.c.l.b16 %v53
  %v198 = vunpack.c.l.b16 %v54
  %v199 = vunpack.c.l.b16 %v55
  %v200 = vunpack.c.l.b16 %v56
  %v201 = vunpack.c.l.b16 %v57
  %v202 = vunpack.c.l.b16 %v58
  %v203 = vunpack.c.l.b16 %v59
  %v204 = vunpack.c.l.b16 %v60
  %v205 = vunpack.c.l.b16 %v61
  %v206 = vunpack.c.l.b16 %v62
  %v207 = vunpack.c.l.b16 %v63
  %v208 = vunpack.c.l.b16 %v64
  %v209 = vunpack.c.l.b16 %v65
  %v210 = vunpack.c.l.b16 %v66
  %v211 = vunpack.c.l.b16 %v67
  %v212 = vunpack.c.l.b16 %v68
  %v213 = vunpack.c.l.b16 %v69
  %v214 = vunpack.c.l.b16 %v70
  %v215 = vpack.c.b16 %v184, %v183
  %v216 = vpack.c.b16 %v186, %v185
  %v217 = vpack.c.b16 %v188, %v187
  %v218 = vpack.c.b16 %v190, %v189
  %v219 = vpack.c.b16 %v192, %v191
  %v220 = vpack.c.b16 %v194, %v193
  %v221 = vpack.c.b16 %v196, %v195
  %v222 = vpack.c.b16 %v198, %v197
  %v223 = vpack.c.b16 %v200, %v199
  %v224 = vpack.c.b16 %v202, %v201
  %v225 = vpack.c.b16 %v204, %v203
  %v226 = vpack.c.b16 %v206, %v205
  %v227 = vpack.c.b16 %v208, %v207
  %v228 = vpack.c.b16 %v210, %v209
  %v229 = vpack.c.b16 %v212, %v211
  %v230 = vpack.c.b16 %v214, %v213
  %vm246 = vcmask 1014784
  %v248 = vsel %vm246, %v146, 0
  %v251 = vsel %vm246, %v148, 0
  %vm253 = vcmask 1045504
  %v255 = vsel %vm253, %v230, 0
  %257 = vmatprep.subr.bf16.mxu0 0
  %258 = vmatpush1.bf16.msra.mxu0 %v222
  %259 = vmatprep.subr.bf16.mxu0 0
  %260 = vmatpush1.bf16.msra.mxu0 %v221
  %261 = vmatprep.subr.bf16.mxu0 0
  %262 = vmatpush1.bf16.msra.mxu0 %v220
  %263 = vmatprep.subr.bf16.mxu0 0
  %264 = vmatpush1.bf16.msra.mxu0 %v219
  %265 = vmatprep.subr.bf16.mxu0 0
  %266 = vmatpush1.bf16.msra.mxu0 %v218
  %267 = vmatprep.subr.bf16.mxu0 0
  %268 = vmatpush1.bf16.msra.mxu0 %v217
  %269 = vmatprep.subr.bf16.mxu0 0
  %270 = vmatpush1.bf16.msra.mxu0 %v216
  %271 = vmatprep.subr.bf16.mxu0 0
  %272 = vmatpush1.bf16.msra.mxu0 %v215
  %273 = vmatprep.subr.bf16.mxu0 0
  %274 = vmatpush2.bf16.msra.mxu0 %v255
  %275 = vmatprep.subr.bf16.mxu0 0
  %276 = vmatpush2.bf16.msra.mxu0 %v229
  %277 = vmatprep.subr.bf16.mxu0 0
  %278 = vmatpush2.bf16.msra.mxu0 %v228
  %279 = vmatprep.subr.bf16.mxu0 0
  %280 = vmatpush2.bf16.msra.mxu0 %v227
  %281 = vmatprep.subr.bf16.mxu0 0
  %282 = vmatpush2.bf16.msra.mxu0 %v226
  %283 = vmatprep.subr.bf16.mxu0 0
  %284 = vmatpush2.bf16.msra.mxu0 %v225
  %285 = vmatprep.subr.bf16.mxu0 0
  %286 = vmatpush2.bf16.msra.mxu0 %v224
  %287 = vmatprep.subr.bf16.mxu0 0
  %288 = vmatpush2.bf16.msra.mxu0 %v223
  %289 = vmatprep.mubr.bf16.mxu0 %v248
  %290 = vmatmul.mubr.bf16.gmra.mxu0 %v145
  %v291 = vpop.f32.mrf.mxu0
  %v292 = vadd.f32 0.0, %v291
  %v293 = vpop.f32.mrf.mxu0
  %v294 = vpop.f32.mrf.mxu0
  %v295 = vadd.f32 0.0, %v294
  %v296 = vpop.f32.mrf.mxu0
  %297 = vmatprep.mubr.bf16.mxu0 %v251
  %298 = vmatmul.mubr.bf16.gmra.mxu0 %v147
  %v299 = vpop.f32.mrf.mxu0
  %v300 = vadd.f32 0.0, %v299
  %v301 = vpop.f32.mrf.mxu0
  %v302 = vpop.f32.mrf.mxu0
  %v303 = vadd.f32 0.0, %v302
  %v304 = vpop.f32.mrf.mxu0
  %305 = vdwg.mxu0
  %v306 = vmax.f32 %v292, %v295
  %v307 = vmax.f32 %v300, %v303
  %v308 = vmax.f32 %v306, %v307
  %v310 = vlaneseq
  %v311 = vshrl.u32 %v310, 7
  %v312 = vsub.s32 0, %v311
  %v313 = vrot.slane %v71, %v312
  %v315 = vadd.f32 %v308, %v313
  %vm316 = vcmp.gt.f32.partialorder %v315, 0.0
  %v317 = vmul.f32 %v315, 0.01
  %v318 = vsel %vm316, %v315, %v317
  %v319 = vpack.c.bf16 %v318, %v318
  %v320 = vld [vmem:[%s4] sm:$0xf]
  %v321 = vld [vmem:[%s4 + $0x4] sm:$0xf]
  %v322 = vld [vmem:[%s4 + $0x8] sm:$0xf]
  %v323 = vld [vmem:[%s4 + $0xc] sm:$0xf]
  %v324 = vld [vmem:[%s4 + $0x10] sm:$0xf]
  %v325 = vld [vmem:[%s4 + $0x14] sm:$0xf]
  %v326 = vld [vmem:[%s4 + $0x18] sm:$0xf]
  %v334 = vunpack.c.l.b16 %v320
  %v335 = vunpack.c.l.b16 %v321
  %v336 = vunpack.c.l.b16 %v322
  %v337 = vunpack.c.l.b16 %v323
  %v338 = vunpack.c.l.b16 %v324
  %v339 = vunpack.c.l.b16 %v325
  %v340 = vunpack.c.l.b16 %v326
  %v341 = vpack.c.b16 %v335, %v334
  %v342 = vpack.c.b16 %v337, %v336
  %v343 = vpack.c.b16 %v339, %v338
  %v344 = vpack.c.b16 %v340, %v340
  %vm348 = vcmask 457728
  %v350 = vsel %vm348, %v319, 0
  %v353 = vsel %vm85, %v344, 0
  %355 = vmatprep.subr.bf16.mxu0 0
  %356 = vmatpush1.bf16.msra.mxu0 0
  %357 = vmatprep.subr.bf16.mxu0 0
  %358 = vmatpush1.bf16.msra.mxu0 0
  %359 = vmatprep.subr.bf16.mxu0 0
  %360 = vmatpush1.bf16.msra.mxu0 0
  %361 = vmatprep.subr.bf16.mxu0 0
  %362 = vmatpush1.bf16.msra.mxu0 0
  %363 = vmatprep.subr.bf16.mxu0 0
  %364 = vmatpush1.bf16.msra.mxu0 %v353
  %365 = vmatprep.subr.bf16.mxu0 0
  %366 = vmatpush1.bf16.msra.mxu0 %v343
  %367 = vmatprep.subr.bf16.mxu0 0
  %368 = vmatpush1.bf16.msra.mxu0 %v342
  %369 = vmatprep.subr.bf16.mxu0 0
  %370 = vmatpush1.bf16.msra.mxu0 %v341
  %371 = vmatprep.subr.bf16.mxu0 0
  %372 = vmatpush2.bf16.msra.mxu0 0
  %373 = vmatprep.subr.bf16.mxu0 0
  %374 = vmatpush2.bf16.msra.mxu0 0
  %375 = vmatprep.subr.bf16.mxu0 0
  %376 = vmatpush2.bf16.msra.mxu0 0
  %377 = vmatprep.subr.bf16.mxu0 0
  %378 = vmatpush2.bf16.msra.mxu0 0
  %379 = vmatprep.subr.bf16.mxu0 0
  %380 = vmatpush2.bf16.msra.mxu0 0
  %381 = vmatprep.subr.bf16.mxu0 0
  %382 = vmatpush2.bf16.msra.mxu0 0
  %383 = vmatprep.subr.bf16.mxu0 0
  %384 = vmatpush2.bf16.msra.mxu0 0
  %385 = vmatprep.subr.bf16.mxu0 0
  %386 = vmatpush2.bf16.msra.mxu0 0
  %387 = vmatprep.mubr.bf16.mxu0 0
  %388 = vmatmul.mubr.bf16.gmra.mxu0 %v350
  %v389 = vpop.f32.mrf.mxu0
  %v390 = vadd.f32 0.0, %v389
  %v391 = vpop.f32.mrf.mxu0
  %v392 = vpop.f32.mrf.mxu0
  %v393 = vpop.f32.mrf.mxu0
  %394 = vdwg.mxu0
  %v395 = vadd.f32 %v124, %v390
  %s396 = scalar_lea.vmem %s0, 32
  %v397 = vld [vmem:[%s396] sm:$0xff]
  %v398 = vld [vmem:[%s396 + $0x8] sm:$0xff]
  %v399 = vld [vmem:[%s396 + $0x10] sm:$0xff]
  %v400 = vld [vmem:[%s396 + $0x18] sm:$0xff]
  %v405 = vunpack.c.l.b16 %v397
  %v406 = vunpack.c.h.b16 %v397
  %v407 = vunpack.c.l.b16 %v398
  %v408 = vunpack.c.h.b16 %v398
  %v409 = vunpack.c.l.b16 %v399
  %v410 = vunpack.c.h.b16 %v399
  %v411 = vunpack.c.l.b16 %v400
  %v412 = vunpack.c.h.b16 %v400
  %v413 = vpack.c.b16 %v407, %v405
  %v414 = vpack.c.b16 %v408, %v406
  %v415 = vpack.c.b16 %v411, %v409
  %v416 = vpack.c.b16 %v412, %v410
  %v420 = vsel %vm246, %v414, 0
  %v423 = vsel %vm246, %v416, 0
  %425 = vmatprep.subr.bf16.mxu0 0
  %426 = vmatpush1.bf16.msra.mxu0 %v222
  %427 = vmatprep.subr.bf16.mxu0 0
  %428 = vmatpush1.bf16.msra.mxu0 %v221
  %429 = vmatprep.subr.bf16.mxu0 0
  %430 = vmatpush1.bf16.msra.mxu0 %v220
  %431 = vmatprep.subr.bf16.mxu0 0
  %432 = vmatpush1.bf16.msra.mxu0 %v219
  %433 = vmatprep.subr.bf16.mxu0 0
  %434 = vmatpush1.bf16.msra.mxu0 %v218
  %435 = vmatprep.subr.bf16.mxu0 0
  %436 = vmatpush1.bf16.msra.mxu0 %v217
  %437 = vmatprep.subr.bf16.mxu0 0
  %438 = vmatpush1.bf16.msra.mxu0 %v216
  %439 = vmatprep.subr.bf16.mxu0 0
  %440 = vmatpush1.bf16.msra.mxu0 %v215
  %441 = vmatprep.subr.bf16.mxu0 0
  %442 = vmatpush2.bf16.msra.mxu0 %v255
  %443 = vmatprep.subr.bf16.mxu0 0
  %444 = vmatpush2.bf16.msra.mxu0 %v229
  %445 = vmatprep.subr.bf16.mxu0 0
  %446 = vmatpush2.bf16.msra.mxu0 %v228
  %447 = vmatprep.subr.bf16.mxu0 0
  %448 = vmatpush2.bf16.msra.mxu0 %v227
  %449 = vmatprep.subr.bf16.mxu0 0
  %450 = vmatpush2.bf16.msra.mxu0 %v226
  %451 = vmatprep.subr.bf16.mxu0 0
  %452 = vmatpush2.bf16.msra.mxu0 %v225
  %453 = vmatprep.subr.bf16.mxu0 0
  %454 = vmatpush2.bf16.msra.mxu0 %v224
  %455 = vmatprep.subr.bf16.mxu0 0
  %456 = vmatpush2.bf16.msra.mxu0 %v223
  %457 = vmatprep.mubr.bf16.mxu0 %v420
  %458 = vmatmul.mubr.bf16.gmra.mxu0 %v413
  %v459 = vpop.f32.mrf.mxu0
  %v460 = vadd.f32 0.0, %v459
  %v461 = vpop.f32.mrf.mxu0
  %v462 = vpop.f32.mrf.mxu0
  %v463 = vadd.f32 0.0, %v462
  %v464 = vpop.f32.mrf.mxu0
  %465 = vmatprep.mubr.bf16.mxu0 %v423
  %466 = vmatmul.mubr.bf16.gmra.mxu0 %v415
  %v467 = vpop.f32.mrf.mxu0
  %v468 = vadd.f32 0.0, %v467
  %v469 = vpop.f32.mrf.mxu0
  %v470 = vpop.f32.mrf.mxu0
  %v471 = vadd.f32 0.0, %v470
  %v472 = vpop.f32.mrf.mxu0
  %473 = vdwg.mxu0
  %v474 = vmax.f32 %v460, %v463
  %v475 = vmax.f32 %v468, %v471
  %v476 = vmax.f32 %v474, %v475
  %v477 = vadd.f32 %v476, %v313
  %vm478 = vcmp.gt.f32.partialorder %v477, 0.0
  %v479 = vmul.f32 %v477, 0.01
  %v480 = vsel %vm478, %v477, %v479
  %v481 = vpack.c.bf16 %v480, %v480
  %s482 = scalar_lea.vmem %s4, 28
  %v483 = vld [vmem:[%s482] sm:$0xf]
  %v484 = vld [vmem:[%s482 + $0x4] sm:$0xf]
  %v485 = vld [vmem:[%s482 + $0x8] sm:$0xf]
  %v486 = vld [vmem:[%s482 + $0xc] sm:$0xf]
  %v487 = vld [vmem:[%s482 + $0x10] sm:$0xf]
  %v488 = vld [vmem:[%s482 + $0x14] sm:$0xf]
  %v489 = vld [vmem:[%s482 + $0x18] sm:$0xf]
  %v497 = vunpack.c.l.b16 %v483
  %v498 = vunpack.c.l.b16 %v484
  %v499 = vunpack.c.l.b16 %v485
  %v500 = vunpack.c.l.b16 %v486
  %v501 = vunpack.c.l.b16 %v487
  %v502 = vunpack.c.l.b16 %v488
  %v503 = vunpack.c.l.b16 %v489
  %v504 = vpack.c.b16 %v498, %v497
  %v505 = vpack.c.b16 %v500, %v499
  %v506 = vpack.c.b16 %v502, %v501
  %v507 = vpack.c.b16 %v503, %v503
  %v512 = vsel %vm348, %v481, 0
  %v515 = vsel %vm85, %v507, 0
  %517 = vmatprep.subr.bf16.mxu0 0
  %518 = vmatpush1.bf16.msra.mxu0 0
  %519 = vmatprep.subr.bf16.mxu0 0
  %520 = vmatpush1.bf16.msra.mxu0 0
  %521 = vmatprep.subr.bf16.mxu0 0
  %522 = vmatpush1.bf16.msra.mxu0 0
  %523 = vmatprep.subr.bf16.mxu0 0
  %524 = vmatpush1.bf16.msra.mxu0 0
  %525 = vmatprep.subr.bf16.mxu0 0
  %526 = vmatpush1.bf16.msra.mxu0 %v515
  %527 = vmatprep.subr.bf16.mxu0 0
  %528 = vmatpush1.bf16.msra.mxu0 %v506
  %529 = vmatprep.subr.bf16.mxu0 0
  %530 = vmatpush1.bf16.msra.mxu0 %v505
  %531 = vmatprep.subr.bf16.mxu0 0
  %532 = vmatpush1.bf16.msra.mxu0 %v504
  %533 = vmatprep.subr.bf16.mxu0 0
  %534 = vmatpush2.bf16.msra.mxu0 0
  %535 = vmatprep.subr.bf16.mxu0 0
  %536 = vmatpush2.bf16.msra.mxu0 0
  %537 = vmatprep.subr.bf16.mxu0 0
  %538 = vmatpush2.bf16.msra.mxu0 0
  %539 = vmatprep.subr.bf16.mxu0 0
  %540 = vmatpush2.bf16.msra.mxu0 0
  %541 = vmatprep.subr.bf16.mxu0 0
  %542 = vmatpush2.bf16.msra.mxu0 0
  %543 = vmatprep.subr.bf16.mxu0 0
  %544 = vmatpush2.bf16.msra.mxu0 0
  %545 = vmatprep.subr.bf16.mxu0 0
  %546 = vmatpush2.bf16.msra.mxu0 0
  %547 = vmatprep.subr.bf16.mxu0 0
  %548 = vmatpush2.bf16.msra.mxu0 0
  %549 = vmatprep.mubr.bf16.mxu0 0
  %550 = vmatmul.mubr.bf16.gmra.mxu0 %v512
  %v551 = vpop.f32.mrf.mxu0
  %v552 = vadd.f32 0.0, %v551
  %v553 = vpop.f32.mrf.mxu0
  %v554 = vpop.f32.mrf.mxu0
  %v555 = vpop.f32.mrf.mxu0
  %556 = vdwg.mxu0
  %v557 = vadd.f32 %v395, %v552
  %s558 = scalar_lea.vmem %s0, 64
  %v559 = vld [vmem:[%s558] sm:$0xff]
  %v560 = vld [vmem:[%s558 + $0x8] sm:$0xff]
  %v561 = vld [vmem:[%s558 + $0x10] sm:$0xff]
  %v562 = vld [vmem:[%s558 + $0x18] sm:$0xff]
  %v567 = vunpack.c.l.b16 %v559
  %v568 = vunpack.c.h.b16 %v559
  %v569 = vunpack.c.l.b16 %v560
  %v570 = vunpack.c.h.b16 %v560
  %v571 = vunpack.c.l.b16 %v561
  %v572 = vunpack.c.h.b16 %v561
  %v573 = vunpack.c.l.b16 %v562
  %v574 = vunpack.c.h.b16 %v562
  %v575 = vpack.c.b16 %v569, %v567
  %v576 = vpack.c.b16 %v570, %v568
  %v577 = vpack.c.b16 %v573, %v571
  %v578 = vpack.c.b16 %v574, %v572
  %v582 = vsel %vm246, %v576, 0
  %v585 = vsel %vm246, %v578, 0
  %587 = vmatprep.subr.bf16.mxu0 0
  %588 = vmatpush1.bf16.msra.mxu0 %v222
  %589 = vmatprep.subr.bf16.mxu0 0
  %590 = vmatpush1.bf16.msra.mxu0 %v221
  %591 = vmatprep.subr.bf16.mxu0 0
  %592 = vmatpush1.bf16.msra.mxu0 %v220
  %593 = vmatprep.subr.bf16.mxu0 0
  %594 = vmatpush1.bf16.msra.mxu0 %v219
  %595 = vmatprep.subr.bf16.mxu0 0
  %596 = vmatpush1.bf16.msra.mxu0 %v218
  %597 = vmatprep.subr.bf16.mxu0 0
  %598 = vmatpush1.bf16.msra.mxu0 %v217
  %599 = vmatprep.subr.bf16.mxu0 0
  %600 = vmatpush1.bf16.msra.mxu0 %v216
  %601 = vmatprep.subr.bf16.mxu0 0
  %602 = vmatpush1.bf16.msra.mxu0 %v215
  %603 = vmatprep.subr.bf16.mxu0 0
  %604 = vmatpush2.bf16.msra.mxu0 %v255
  %605 = vmatprep.subr.bf16.mxu0 0
  %606 = vmatpush2.bf16.msra.mxu0 %v229
  %607 = vmatprep.subr.bf16.mxu0 0
  %608 = vmatpush2.bf16.msra.mxu0 %v228
  %609 = vmatprep.subr.bf16.mxu0 0
  %610 = vmatpush2.bf16.msra.mxu0 %v227
  %611 = vmatprep.subr.bf16.mxu0 0
  %612 = vmatpush2.bf16.msra.mxu0 %v226
  %613 = vmatprep.subr.bf16.mxu0 0
  %614 = vmatpush2.bf16.msra.mxu0 %v225
  %615 = vmatprep.subr.bf16.mxu0 0
  %616 = vmatpush2.bf16.msra.mxu0 %v224
  %617 = vmatprep.subr.bf16.mxu0 0
  %618 = vmatpush2.bf16.msra.mxu0 %v223
  %619 = vmatprep.mubr.bf16.mxu0 %v582
  %620 = vmatmul.mubr.bf16.gmra.mxu0 %v575
  %v621 = vpop.f32.mrf.mxu0
  %v622 = vadd.f32 0.0, %v621
  %v623 = vpop.f32.mrf.mxu0
  %v624 = vpop.f32.mrf.mxu0
  %v625 = vadd.f32 0.0, %v624
  %v626 = vpop.f32.mrf.mxu0
  %627 = vmatprep.mubr.bf16.mxu0 %v585
  %628 = vmatmul.mubr.bf16.gmra.mxu0 %v577
  %v629 = vpop.f32.mrf.mxu0
  %v630 = vadd.f32 0.0, %v629
  %v631 = vpop.f32.mrf.mxu0
  %v632 = vpop.f32.mrf.mxu0
  %v633 = vadd.f32 0.0, %v632
  %v634 = vpop.f32.mrf.mxu0
  %635 = vdwg.mxu0
  %v636 = vmax.f32 %v622, %v625
  %v637 = vmax.f32 %v630, %v633
  %v638 = vmax.f32 %v636, %v637
  %v639 = vadd.f32 %v638, %v313
  %vm640 = vcmp.gt.f32.partialorder %v639, 0.0
  %v641 = vmul.f32 %v639, 0.01
  %v642 = vsel %vm640, %v639, %v641
  %v643 = vpack.c.bf16 %v642, %v642
  %s644 = scalar_lea.vmem %s4, 56
  %v645 = vld [vmem:[%s644] sm:$0xf]
  %v646 = vld [vmem:[%s644 + $0x4] sm:$0xf]
  %v647 = vld [vmem:[%s644 + $0x8] sm:$0xf]
  %v648 = vld [vmem:[%s644 + $0xc] sm:$0xf]
  %v649 = vld [vmem:[%s644 + $0x10] sm:$0xf]
  %v650 = vld [vmem:[%s644 + $0x14] sm:$0xf]
  %v651 = vld [vmem:[%s644 + $0x18] sm:$0xf]
  %v659 = vunpack.c.l.b16 %v645
  %v660 = vunpack.c.l.b16 %v646
  %v661 = vunpack.c.l.b16 %v647
  %v662 = vunpack.c.l.b16 %v648
  %v663 = vunpack.c.l.b16 %v649
  %v664 = vunpack.c.l.b16 %v650
  %v665 = vunpack.c.l.b16 %v651
  %v666 = vpack.c.b16 %v660, %v659
  %v667 = vpack.c.b16 %v662, %v661
  %v668 = vpack.c.b16 %v664, %v663
  %v669 = vpack.c.b16 %v665, %v665
  %v674 = vsel %vm348, %v643, 0
  %v677 = vsel %vm85, %v669, 0
  %679 = vmatprep.subr.bf16.mxu0 0
  %680 = vmatpush1.bf16.msra.mxu0 0
  %681 = vmatprep.subr.bf16.mxu0 0
  %682 = vmatpush1.bf16.msra.mxu0 0
  %683 = vmatprep.subr.bf16.mxu0 0
  %684 = vmatpush1.bf16.msra.mxu0 0
  %685 = vmatprep.subr.bf16.mxu0 0
  %686 = vmatpush1.bf16.msra.mxu0 0
  %687 = vmatprep.subr.bf16.mxu0 0
  %688 = vmatpush1.bf16.msra.mxu0 %v677
  %689 = vmatprep.subr.bf16.mxu0 0
  %690 = vmatpush1.bf16.msra.mxu0 %v668
  %691 = vmatprep.subr.bf16.mxu0 0
  %692 = vmatpush1.bf16.msra.mxu0 %v667
  %693 = vmatprep.subr.bf16.mxu0 0
  %694 = vmatpush1.bf16.msra.mxu0 %v666
  %695 = vmatprep.subr.bf16.mxu0 0
  %696 = vmatpush2.bf16.msra.mxu0 0
  %697 = vmatprep.subr.bf16.mxu0 0
  %698 = vmatpush2.bf16.msra.mxu0 0
  %699 = vmatprep.subr.bf16.mxu0 0
  %700 = vmatpush2.bf16.msra.mxu0 0
  %701 = vmatprep.subr.bf16.mxu0 0
  %702 = vmatpush2.bf16.msra.mxu0 0
  %703 = vmatprep.subr.bf16.mxu0 0
  %704 = vmatpush2.bf16.msra.mxu0 0
  %705 = vmatprep.subr.bf16.mxu0 0
  %706 = vmatpush2.bf16.msra.mxu0 0
  %707 = vmatprep.subr.bf16.mxu0 0
  %708 = vmatpush2.bf16.msra.mxu0 0
  %709 = vmatprep.subr.bf16.mxu0 0
  %710 = vmatpush2.bf16.msra.mxu0 0
  %711 = vmatprep.mubr.bf16.mxu0 0
  %712 = vmatmul.mubr.bf16.gmra.mxu0 %v674
  %v713 = vpop.f32.mrf.mxu0
  %v714 = vadd.f32 0.0, %v713
  %v715 = vpop.f32.mrf.mxu0
  %v716 = vpop.f32.mrf.mxu0
  %v717 = vpop.f32.mrf.mxu0
  %718 = vdwg.mxu0
  %v719 = vadd.f32 %v557, %v714
  %s720 = scalar_lea.vmem %s0, 96
  %v721 = vld [vmem:[%s720] sm:$0xff]
  %v722 = vld [vmem:[%s720 + $0x8] sm:$0xff]
  %v723 = vld [vmem:[%s720 + $0x10] sm:$0xff]
  %v724 = vld [vmem:[%s720 + $0x18] sm:$0xff]
  %v729 = vunpack.c.l.b16 %v721
  %v730 = vunpack.c.h.b16 %v721
  %v731 = vunpack.c.l.b16 %v722
  %v732 = vunpack.c.h.b16 %v722
  %v733 = vunpack.c.l.b16 %v723
  %v734 = vunpack.c.h.b16 %v723
  %v735 = vunpack.c.l.b16 %v724
  %v736 = vunpack.c.h.b16 %v724
  %v737 = vpack.c.b16 %v731, %v729
  %v738 = vpack.c.b16 %v732, %v730
  %v739 = vpack.c.b16 %v735, %v733
  %v740 = vpack.c.b16 %v736, %v734
  %v744 = vsel %vm246, %v738, 0
  %v747 = vsel %vm246, %v740, 0
  %749 = vmatprep.subr.bf16.mxu0 0
  %750 = vmatpush1.bf16.msra.mxu0 %v222
  %751 = vmatprep.subr.bf16.mxu0 0
  %752 = vmatpush1.bf16.msra.mxu0 %v221
  %753 = vmatprep.subr.bf16.mxu0 0
  %754 = vmatpush1.bf16.msra.mxu0 %v220
  %755 = vmatprep.subr.bf16.mxu0 0
  %756 = vmatpush1.bf16.msra.mxu0 %v219
  %757 = vmatprep.subr.bf16.mxu0 0
  %758 = vmatpush1.bf16.msra.mxu0 %v218
  %759 = vmatprep.subr.bf16.mxu0 0
  %760 = vmatpush1.bf16.msra.mxu0 %v217
  %761 = vmatprep.subr.bf16.mxu0 0
  %762 = vmatpush1.bf16.msra.mxu0 %v216
  %763 = vmatprep.subr.bf16.mxu0 0
  %764 = vmatpush1.bf16.msra.mxu0 %v215
  %765 = vmatprep.subr.bf16.mxu0 0
  %766 = vmatpush2.bf16.msra.mxu0 %v255
  %767 = vmatprep.subr.bf16.mxu0 0
  %768 = vmatpush2.bf16.msra.mxu0 %v229
  %769 = vmatprep.subr.bf16.mxu0 0
  %770 = vmatpush2.bf16.msra.mxu0 %v228
  %771 = vmatprep.subr.bf16.mxu0 0
  %772 = vmatpush2.bf16.msra.mxu0 %v227
  %773 = vmatprep.subr.bf16.mxu0 0
  %774 = vmatpush2.bf16.msra.mxu0 %v226
  %775 = vmatprep.subr.bf16.mxu0 0
  %776 = vmatpush2.bf16.msra.mxu0 %v225
  %777 = vmatprep.subr.bf16.mxu0 0
  %778 = vmatpush2.bf16.msra.mxu0 %v224
  %779 = vmatprep.subr.bf16.mxu0 0
  %780 = vmatpush2.bf16.msra.mxu0 %v223
  %781 = vmatprep.mubr.bf16.mxu0 %v744
  %782 = vmatmul.mubr.bf16.gmra.mxu0 %v737
  %v783 = vpop.f32.mrf.mxu0
  %v784 = vadd.f32 0.0, %v783
  %v785 = vpop.f32.mrf.mxu0
  %v786 = vpop.f32.mrf.mxu0
  %v787 = vadd.f32 0.0, %v786
  %v788 = vpop.f32.mrf.mxu0
  %789 = vmatprep.mubr.bf16.mxu0 %v747
  %790 = vmatmul.mubr.bf16.gmra.mxu0 %v739
  %v791 = vpop.f32.mrf.mxu0
  %v792 = vadd.f32 0.0, %v791
  %v793 = vpop.f32.mrf.mxu0
  %v794 = vpop.f32.mrf.mxu0
  %v795 = vadd.f32 0.0, %v794
  %v796 = vpop.f32.mrf.mxu0
  %797 = vdwg.mxu0
  %v798 = vmax.f32 %v784, %v787
  %v799 = vmax.f32 %v792, %v795
  %v800 = vmax.f32 %v798, %v799
  %v801 = vadd.f32 %v800, %v313
  %vm802 = vcmp.gt.f32.partialorder %v801, 0.0
  %v803 = vmul.f32 %v801, 0.01
  %v804 = vsel %vm802, %v801, %v803
  %v805 = vpack.c.bf16 %v804, %v804
  %s806 = scalar_lea.vmem %s4, 84
  %v807 = vld [vmem:[%s806] sm:$0xf]
  %v808 = vld [vmem:[%s806 + $0x4] sm:$0xf]
  %v809 = vld [vmem:[%s806 + $0x8] sm:$0xf]
  %v810 = vld [vmem:[%s806 + $0xc] sm:$0xf]
  %v811 = vld [vmem:[%s806 + $0x10] sm:$0xf]
  %v812 = vld [vmem:[%s806 + $0x14] sm:$0xf]
  %v813 = vld [vmem:[%s806 + $0x18] sm:$0xf]
  %v821 = vunpack.c.l.b16 %v807
  %v822 = vunpack.c.l.b16 %v808
  %v823 = vunpack.c.l.b16 %v809
  %v824 = vunpack.c.l.b16 %v810
  %v825 = vunpack.c.l.b16 %v811
  %v826 = vunpack.c.l.b16 %v812
  %v827 = vunpack.c.l.b16 %v813
  %v828 = vpack.c.b16 %v822, %v821
  %v829 = vpack.c.b16 %v824, %v823
  %v830 = vpack.c.b16 %v826, %v825
  %v831 = vpack.c.b16 %v827, %v827
  %v836 = vsel %vm348, %v805, 0
  %v839 = vsel %vm85, %v831, 0
  %841 = vmatprep.subr.bf16.mxu0 0
  %842 = vmatpush1.bf16.msra.mxu0 0
  %843 = vmatprep.subr.bf16.mxu0 0
  %844 = vmatpush1.bf16.msra.mxu0 0
  %845 = vmatprep.subr.bf16.mxu0 0
  %846 = vmatpush1.bf16.msra.mxu0 0
  %847 = vmatprep.subr.bf16.mxu0 0
  %848 = vmatpush1.bf16.msra.mxu0 0
  %849 = vmatprep.subr.bf16.mxu0 0
  %850 = vmatpush1.bf16.msra.mxu0 %v839
  %851 = vmatprep.subr.bf16.mxu0 0
  %852 = vmatpush1.bf16.msra.mxu0 %v830
  %853 = vmatprep.subr.bf16.mxu0 0
  %854 = vmatpush1.bf16.msra.mxu0 %v829
  %855 = vmatprep.subr.bf16.mxu0 0
  %856 = vmatpush1.bf16.msra.mxu0 %v828
  %857 = vmatprep.subr.bf16.mxu0 0
  %858 = vmatpush2.bf16.msra.mxu0 0
  %859 = vmatprep.subr.bf16.mxu0 0
  %860 = vmatpush2.bf16.msra.mxu0 0
  %861 = vmatprep.subr.bf16.mxu0 0
  %862 = vmatpush2.bf16.msra.mxu0 0
  %863 = vmatprep.subr.bf16.mxu0 0
  %864 = vmatpush2.bf16.msra.mxu0 0
  %865 = vmatprep.subr.bf16.mxu0 0
  %866 = vmatpush2.bf16.msra.mxu0 0
  %867 = vmatprep.subr.bf16.mxu0 0
  %868 = vmatpush2.bf16.msra.mxu0 0
  %869 = vmatprep.subr.bf16.mxu0 0
  %870 = vmatpush2.bf16.msra.mxu0 0
  %871 = vmatprep.subr.bf16.mxu0 0
  %872 = vmatpush2.bf16.msra.mxu0 0
  %873 = vmatprep.mubr.bf16.mxu0 0
  %874 = vmatmul.mubr.bf16.gmra.mxu0 %v836
  %v875 = vpop.f32.mrf.mxu0
  %v876 = vadd.f32 0.0, %v875
  %v877 = vpop.f32.mrf.mxu0
  %v878 = vpop.f32.mrf.mxu0
  %v879 = vpop.f32.mrf.mxu0
  %880 = vdwg.mxu0
  %v881 = vadd.f32 %v719, %v876
  %s882 = scalar_lea.vmem %s0, 128
  %v883 = vld [vmem:[%s882] sm:$0xff]
  %v884 = vld [vmem:[%s882 + $0x8] sm:$0xff]
  %v885 = vld [vmem:[%s882 + $0x10] sm:$0xff]
  %v886 = vld [vmem:[%s882 + $0x18] sm:$0xff]
  %v891 = vunpack.c.l.b16 %v883
  %v892 = vunpack.c.h.b16 %v883
  %v893 = vunpack.c.l.b16 %v884
  %v894 = vunpack.c.h.b16 %v884
  %v895 = vunpack.c.l.b16 %v885
  %v896 = vunpack.c.h.b16 %v885
  %v897 = vunpack.c.l.b16 %v886
  %v898 = vunpack.c.h.b16 %v886
  %v899 = vpack.c.b16 %v893, %v891
  %v900 = vpack.c.b16 %v894, %v892
  %v901 = vpack.c.b16 %v897, %v895
  %v902 = vpack.c.b16 %v898, %v896
  %v906 = vsel %vm246, %v900, 0
  %v909 = vsel %vm246, %v902, 0
  %911 = vmatprep.subr.bf16.mxu0 0
  %912 = vmatpush1.bf16.msra.mxu0 %v222
  %913 = vmatprep.subr.bf16.mxu0 0
  %914 = vmatpush1.bf16.msra.mxu0 %v221
  %915 = vmatprep.subr.bf16.mxu0 0
  %916 = vmatpush1.bf16.msra.mxu0 %v220
  %917 = vmatprep.subr.bf16.mxu0 0
  %918 = vmatpush1.bf16.msra.mxu0 %v219
  %919 = vmatprep.subr.bf16.mxu0 0
  %920 = vmatpush1.bf16.msra.mxu0 %v218
  %921 = vmatprep.subr.bf16.mxu0 0
  %922 = vmatpush1.bf16.msra.mxu0 %v217
  %923 = vmatprep.subr.bf16.mxu0 0
  %924 = vmatpush1.bf16.msra.mxu0 %v216
  %925 = vmatprep.subr.bf16.mxu0 0
  %926 = vmatpush1.bf16.msra.mxu0 %v215
  %927 = vmatprep.subr.bf16.mxu0 0
  %928 = vmatpush2.bf16.msra.mxu0 %v255
  %929 = vmatprep.subr.bf16.mxu0 0
  %930 = vmatpush2.bf16.msra.mxu0 %v229
  %931 = vmatprep.subr.bf16.mxu0 0
  %932 = vmatpush2.bf16.msra.mxu0 %v228
  %933 = vmatprep.subr.bf16.mxu0 0
  %934 = vmatpush2.bf16.msra.mxu0 %v227
  %935 = vmatprep.subr.bf16.mxu0 0
  %936 = vmatpush2.bf16.msra.mxu0 %v226
  %937 = vmatprep.subr.bf16.mxu0 0
  %938 = vmatpush2.bf16.msra.mxu0 %v225
  %939 = vmatprep.subr.bf16.mxu0 0
  %940 = vmatpush2.bf16.msra.mxu0 %v224
  %941 = vmatprep.subr.bf16.mxu0 0
  %942 = vmatpush2.bf16.msra.mxu0 %v223
  %943 = vmatprep.mubr.bf16.mxu0 %v906
  %944 = vmatmul.mubr.bf16.gmra.mxu0 %v899
  %v945 = vpop.f32.mrf.mxu0
  %v946 = vadd.f32 0.0, %v945
  %v947 = vpop.f32.mrf.mxu0
  %v948 = vpop.f32.mrf.mxu0
  %v949 = vadd.f32 0.0, %v948
  %v950 = vpop.f32.mrf.mxu0
  %951 = vmatprep.mubr.bf16.mxu0 %v909
  %952 = vmatmul.mubr.bf16.gmra.mxu0 %v901
  %v953 = vpop.f32.mrf.mxu0
  %v954 = vadd.f32 0.0, %v953
  %v955 = vpop.f32.mrf.mxu0
  %v956 = vpop.f32.mrf.mxu0
  %v957 = vadd.f32 0.0, %v956
  %v958 = vpop.f32.mrf.mxu0
  %959 = vdwg.mxu0
  %v960 = vmax.f32 %v946, %v949
  %v961 = vmax.f32 %v954, %v957
  %v962 = vmax.f32 %v960, %v961
  %v963 = vadd.f32 %v962, %v313
  %vm964 = vcmp.gt.f32.partialorder %v963, 0.0
  %v965 = vmul.f32 %v963, 0.01
  %v966 = vsel %vm964, %v963, %v965
  %v967 = vpack.c.bf16 %v966, %v966
  %s968 = scalar_lea.vmem %s4, 112
  %v969 = vld [vmem:[%s968] sm:$0xf]
  %v970 = vld [vmem:[%s968 + $0x4] sm:$0xf]
  %v971 = vld [vmem:[%s968 + $0x8] sm:$0xf]
  %v972 = vld [vmem:[%s968 + $0xc] sm:$0xf]
  %v973 = vld [vmem:[%s968 + $0x10] sm:$0xf]
  %v974 = vld [vmem:[%s968 + $0x14] sm:$0xf]
  %v975 = vld [vmem:[%s968 + $0x18] sm:$0xf]
  %v983 = vunpack.c.l.b16 %v969
  %v984 = vunpack.c.l.b16 %v970
  %v985 = vunpack.c.l.b16 %v971
  %v986 = vunpack.c.l.b16 %v972
  %v987 = vunpack.c.l.b16 %v973
  %v988 = vunpack.c.l.b16 %v974
  %v989 = vunpack.c.l.b16 %v975
  %v990 = vpack.c.b16 %v984, %v983
  %v991 = vpack.c.b16 %v986, %v985
  %v992 = vpack.c.b16 %v988, %v987
  %v993 = vpack.c.b16 %v989, %v989
  %v998 = vsel %vm348, %v967, 0
  %v1001 = vsel %vm85, %v993, 0
  %1003 = vmatprep.subr.bf16.mxu0 0
  %1004 = vmatpush1.bf16.msra.mxu0 0
  %1005 = vmatprep.subr.bf16.mxu0 0
  %1006 = vmatpush1.bf16.msra.mxu0 0
  %1007 = vmatprep.subr.bf16.mxu0 0
  %1008 = vmatpush1.bf16.msra.mxu0 0
  %1009 = vmatprep.subr.bf16.mxu0 0
  %1010 = vmatpush1.bf16.msra.mxu0 0
  %1011 = vmatprep.subr.bf16.mxu0 0
  %1012 = vmatpush1.bf16.msra.mxu0 %v1001
  %1013 = vmatprep.subr.bf16.mxu0 0
  %1014 = vmatpush1.bf16.msra.mxu0 %v992
  %1015 = vmatprep.subr.bf16.mxu0 0
  %1016 = vmatpush1.bf16.msra.mxu0 %v991
  %1017 = vmatprep.subr.bf16.mxu0 0
  %1018 = vmatpush1.bf16.msra.mxu0 %v990
  %1019 = vmatprep.subr.bf16.mxu0 0
  %1020 = vmatpush2.bf16.msra.mxu0 0
  %1021 = vmatprep.subr.bf16.mxu0 0
  %1022 = vmatpush2.bf16.msra.mxu0 0
  %1023 = vmatprep.subr.bf16.mxu0 0
  %1024 = vmatpush2.bf16.msra.mxu0 0
  %1025 = vmatprep.subr.bf16.mxu0 0
  %1026 = vmatpush2.bf16.msra.mxu0 0
  %1027 = vmatprep.subr.bf16.mxu0 0
  %1028 = vmatpush2.bf16.msra.mxu0 0
  %1029 = vmatprep.subr.bf16.mxu0 0
  %1030 = vmatpush2.bf16.msra.mxu0 0
  %1031 = vmatprep.subr.bf16.mxu0 0
  %1032 = vmatpush2.bf16.msra.mxu0 0
  %1033 = vmatprep.subr.bf16.mxu0 0
  %1034 = vmatpush2.bf16.msra.mxu0 0
  %1035 = vmatprep.mubr.bf16.mxu0 0
  %1036 = vmatmul.mubr.bf16.gmra.mxu0 %v998
  %v1037 = vpop.f32.mrf.mxu0
  %v1038 = vadd.f32 0.0, %v1037
  %v1039 = vpop.f32.mrf.mxu0
  %v1040 = vpop.f32.mrf.mxu0
  %v1041 = vpop.f32.mrf.mxu0
  %1042 = vdwg.mxu0
  %v1043 = vadd.f32 %v881, %v1038
  %s1044 = scalar_lea.vmem %s0, 160
  %v1045 = vld [vmem:[%s1044] sm:$0xff]
  %v1046 = vld [vmem:[%s1044 + $0x8] sm:$0xff]
  %v1047 = vld [vmem:[%s1044 + $0x10] sm:$0xff]
  %v1048 = vld [vmem:[%s1044 + $0x18] sm:$0xff]
  %v1053 = vunpack.c.l.b16 %v1045
  %v1054 = vunpack.c.h.b16 %v1045
  %v1055 = vunpack.c.l.b16 %v1046
  %v1056 = vunpack.c.h.b16 %v1046
  %v1057 = vunpack.c.l.b16 %v1047
  %v1058 = vunpack.c.h.b16 %v1047
  %v1059 = vunpack.c.l.b16 %v1048
  %v1060 = vunpack.c.h.b16 %v1048
  %v1061 = vpack.c.b16 %v1055, %v1053
  %v1062 = vpack.c.b16 %v1056, %v1054
  %v1063 = vpack.c.b16 %v1059, %v1057
  %v1064 = vpack.c.b16 %v1060, %v1058
  %v1068 = vsel %vm246, %v1062, 0
  %v1071 = vsel %vm246, %v1064, 0
  %1073 = vmatprep.subr.bf16.mxu0 0
  %1074 = vmatpush1.bf16.msra.mxu0 %v222
  %1075 = vmatprep.subr.bf16.mxu0 0
  %1076 = vmatpush1.bf16.msra.mxu0 %v221
  %1077 = vmatprep.subr.bf16.mxu0 0
  %1078 = vmatpush1.bf16.msra.mxu0 %v220
  %1079 = vmatprep.subr.bf16.mxu0 0
  %1080 = vmatpush1.bf16.msra.mxu0 %v219
  %1081 = vmatprep.subr.bf16.mxu0 0
  %1082 = vmatpush1.bf16.msra.mxu0 %v218
  %1083 = vmatprep.subr.bf16.mxu0 0
  %1084 = vmatpush1.bf16.msra.mxu0 %v217
  %1085 = vmatprep.subr.bf16.mxu0 0
  %1086 = vmatpush1.bf16.msra.mxu0 %v216
  %1087 = vmatprep.subr.bf16.mxu0 0
  %1088 = vmatpush1.bf16.msra.mxu0 %v215
  %1089 = vmatprep.subr.bf16.mxu0 0
  %1090 = vmatpush2.bf16.msra.mxu0 %v255
  %1091 = vmatprep.subr.bf16.mxu0 0
  %1092 = vmatpush2.bf16.msra.mxu0 %v229
  %1093 = vmatprep.subr.bf16.mxu0 0
  %1094 = vmatpush2.bf16.msra.mxu0 %v228
  %1095 = vmatprep.subr.bf16.mxu0 0
  %1096 = vmatpush2.bf16.msra.mxu0 %v227
  %1097 = vmatprep.subr.bf16.mxu0 0
  %1098 = vmatpush2.bf16.msra.mxu0 %v226
  %1099 = vmatprep.subr.bf16.mxu0 0
  %1100 = vmatpush2.bf16.msra.mxu0 %v225
  %1101 = vmatprep.subr.bf16.mxu0 0
  %1102 = vmatpush2.bf16.msra.mxu0 %v224
  %1103 = vmatprep.subr.bf16.mxu0 0
  %1104 = vmatpush2.bf16.msra.mxu0 %v223
  %1105 = vmatprep.mubr.bf16.mxu0 %v1068
  %1106 = vmatmul.mubr.bf16.gmra.mxu0 %v1061
  %v1107 = vpop.f32.mrf.mxu0
  %v1108 = vadd.f32 0.0, %v1107
  %v1109 = vpop.f32.mrf.mxu0
  %v1110 = vpop.f32.mrf.mxu0
  %v1111 = vadd.f32 0.0, %v1110
  %v1112 = vpop.f32.mrf.mxu0
  %1113 = vmatprep.mubr.bf16.mxu0 %v1071
  %1114 = vmatmul.mubr.bf16.gmra.mxu0 %v1063
  %v1115 = vpop.f32.mrf.mxu0
  %v1116 = vadd.f32 0.0, %v1115
  %v1117 = vpop.f32.mrf.mxu0
  %v1118 = vpop.f32.mrf.mxu0
  %v1119 = vadd.f32 0.0, %v1118
  %v1120 = vpop.f32.mrf.mxu0
  %1121 = vdwg.mxu0
  %v1122 = vmax.f32 %v1108, %v1111
  %v1123 = vmax.f32 %v1116, %v1119
  %v1124 = vmax.f32 %v1122, %v1123
  %v1125 = vadd.f32 %v1124, %v313
  %vm1126 = vcmp.gt.f32.partialorder %v1125, 0.0
  %v1127 = vmul.f32 %v1125, 0.01
  %v1128 = vsel %vm1126, %v1125, %v1127
  %v1129 = vpack.c.bf16 %v1128, %v1128
  %s1130 = scalar_lea.vmem %s4, 140
  %v1131 = vld [vmem:[%s1130] sm:$0xf]
  %v1132 = vld [vmem:[%s1130 + $0x4] sm:$0xf]
  %v1133 = vld [vmem:[%s1130 + $0x8] sm:$0xf]
  %v1134 = vld [vmem:[%s1130 + $0xc] sm:$0xf]
  %v1135 = vld [vmem:[%s1130 + $0x10] sm:$0xf]
  %v1136 = vld [vmem:[%s1130 + $0x14] sm:$0xf]
  %v1137 = vld [vmem:[%s1130 + $0x18] sm:$0xf]
  %v1145 = vunpack.c.l.b16 %v1131
  %v1146 = vunpack.c.l.b16 %v1132
  %v1147 = vunpack.c.l.b16 %v1133
  %v1148 = vunpack.c.l.b16 %v1134
  %v1149 = vunpack.c.l.b16 %v1135
  %v1150 = vunpack.c.l.b16 %v1136
  %v1151 = vunpack.c.l.b16 %v1137
  %v1152 = vpack.c.b16 %v1146, %v1145
  %v1153 = vpack.c.b16 %v1148, %v1147
  %v1154 = vpack.c.b16 %v1150, %v1149
  %v1155 = vpack.c.b16 %v1151, %v1151
  %v1160 = vsel %vm348, %v1129, 0
  %v1163 = vsel %vm85, %v1155, 0
  %1165 = vmatprep.subr.bf16.mxu0 0
  %1166 = vmatpush1.bf16.msra.mxu0 0
  %1167 = vmatprep.subr.bf16.mxu0 0
  %1168 = vmatpush1.bf16.msra.mxu0 0
  %1169 = vmatprep.subr.bf16.mxu0 0
  %1170 = vmatpush1.bf16.msra.mxu0 0
  %1171 = vmatprep.subr.bf16.mxu0 0
  %1172 = vmatpush1.bf16.msra.mxu0 0
  %1173 = vmatprep.subr.bf16.mxu0 0
  %1174 = vmatpush1.bf16.msra.mxu0 %v1163
  %1175 = vmatprep.subr.bf16.mxu0 0
  %1176 = vmatpush1.bf16.msra.mxu0 %v1154
  %1177 = vmatprep.subr.bf16.mxu0 0
  %1178 = vmatpush1.bf16.msra.mxu0 %v1153
  %1179 = vmatprep.subr.bf16.mxu0 0
  %1180 = vmatpush1.bf16.msra.mxu0 %v1152
  %1181 = vmatprep.subr.bf16.mxu0 0
  %1182 = vmatpush2.bf16.msra.mxu0 0
  %1183 = vmatprep.subr.bf16.mxu0 0
  %1184 = vmatpush2.bf16.msra.mxu0 0
  %1185 = vmatprep.subr.bf16.mxu0 0
  %1186 = vmatpush2.bf16.msra.mxu0 0
  %1187 = vmatprep.subr.bf16.mxu0 0
  %1188 = vmatpush2.bf16.msra.mxu0 0
  %1189 = vmatprep.subr.bf16.mxu0 0
  %1190 = vmatpush2.bf16.msra.mxu0 0
  %1191 = vmatprep.subr.bf16.mxu0 0
  %1192 = vmatpush2.bf16.msra.mxu0 0
  %1193 = vmatprep.subr.bf16.mxu0 0
  %1194 = vmatpush2.bf16.msra.mxu0 0
  %1195 = vmatprep.subr.bf16.mxu0 0
  %1196 = vmatpush2.bf16.msra.mxu0 0
  %1197 = vmatprep.mubr.bf16.mxu0 0
  %1198 = vmatmul.mubr.bf16.gmra.mxu0 %v1160
  %v1199 = vpop.f32.mrf.mxu0
  %v1200 = vadd.f32 0.0, %v1199
  %v1201 = vpop.f32.mrf.mxu0
  %v1202 = vpop.f32.mrf.mxu0
  %v1203 = vpop.f32.mrf.mxu0
  %1204 = vdwg.mxu0
  %v1205 = vadd.f32 %v1043, %v1200
  %s1206 = scalar_lea.vmem %s0, 192
  %v1207 = vld [vmem:[%s1206] sm:$0xff]
  %v1208 = vld [vmem:[%s1206 + $0x8] sm:$0xff]
  %v1209 = vld [vmem:[%s1206 + $0x10] sm:$0xff]
  %v1210 = vld [vmem:[%s1206 + $0x18] sm:$0xff]
  %v1215 = vunpack.c.l.b16 %v1207
  %v1216 = vunpack.c.h.b16 %v1207
  %v1217 = vunpack.c.l.b16 %v1208
  %v1218 = vunpack.c.h.b16 %v1208
  %v1219 = vunpack.c.l.b16 %v1209
  %v1220 = vunpack.c.h.b16 %v1209
  %v1221 = vunpack.c.l.b16 %v1210
  %v1222 = vunpack.c.h.b16 %v1210
  %v1223 = vpack.c.b16 %v1217, %v1215
  %v1224 = vpack.c.b16 %v1218, %v1216
  %v1225 = vpack.c.b16 %v1221, %v1219
  %v1226 = vpack.c.b16 %v1222, %v1220
  %v1230 = vsel %vm246, %v1224, 0
  %v1233 = vsel %vm246, %v1226, 0
  %1235 = vmatprep.subr.bf16.mxu0 0
  %1236 = vmatpush1.bf16.msra.mxu0 %v222
  %1237 = vmatprep.subr.bf16.mxu0 0
  %1238 = vmatpush1.bf16.msra.mxu0 %v221
  %1239 = vmatprep.subr.bf16.mxu0 0
  %1240 = vmatpush1.bf16.msra.mxu0 %v220
  %1241 = vmatprep.subr.bf16.mxu0 0
  %1242 = vmatpush1.bf16.msra.mxu0 %v219
  %1243 = vmatprep.subr.bf16.mxu0 0
  %1244 = vmatpush1.bf16.msra.mxu0 %v218
  %1245 = vmatprep.subr.bf16.mxu0 0
  %1246 = vmatpush1.bf16.msra.mxu0 %v217
  %1247 = vmatprep.subr.bf16.mxu0 0
  %1248 = vmatpush1.bf16.msra.mxu0 %v216
  %1249 = vmatprep.subr.bf16.mxu0 0
  %1250 = vmatpush1.bf16.msra.mxu0 %v215
  %1251 = vmatprep.subr.bf16.mxu0 0
  %1252 = vmatpush2.bf16.msra.mxu0 %v255
  %1253 = vmatprep.subr.bf16.mxu0 0
  %1254 = vmatpush2.bf16.msra.mxu0 %v229
  %1255 = vmatprep.subr.bf16.mxu0 0
  %1256 = vmatpush2.bf16.msra.mxu0 %v228
  %1257 = vmatprep.subr.bf16.mxu0 0
  %1258 = vmatpush2.bf16.msra.mxu0 %v227
  %1259 = vmatprep.subr.bf16.mxu0 0
  %1260 = vmatpush2.bf16.msra.mxu0 %v226
  %1261 = vmatprep.subr.bf16.mxu0 0
  %1262 = vmatpush2.bf16.msra.mxu0 %v225
  %1263 = vmatprep.subr.bf16.mxu0 0
  %1264 = vmatpush2.bf16.msra.mxu0 %v224
  %1265 = vmatprep.subr.bf16.mxu0 0
  %1266 = vmatpush2.bf16.msra.mxu0 %v223
  %1267 = vmatprep.mubr.bf16.mxu0 %v1230
  %1268 = vmatmul.mubr.bf16.gmra.mxu0 %v1223
  %v1269 = vpop.f32.mrf.mxu0
  %v1270 = vadd.f32 0.0, %v1269
  %v1271 = vpop.f32.mrf.mxu0
  %v1272 = vpop.f32.mrf.mxu0
  %v1273 = vadd.f32 0.0, %v1272
  %v1274 = vpop.f32.mrf.mxu0
  %1275 = vmatprep.mubr.bf16.mxu0 %v1233
  %1276 = vmatmul.mubr.bf16.gmra.mxu0 %v1225
  %v1277 = vpop.f32.mrf.mxu0
  %v1278 = vadd.f32 0.0, %v1277
  %v1279 = vpop.f32.mrf.mxu0
  %v1280 = vpop.f32.mrf.mxu0
  %v1281 = vadd.f32 0.0, %v1280
  %v1282 = vpop.f32.mrf.mxu0
  %1283 = vdwg.mxu0
  %v1284 = vmax.f32 %v1270, %v1273
  %v1285 = vmax.f32 %v1278, %v1281
  %v1286 = vmax.f32 %v1284, %v1285
  %v1287 = vadd.f32 %v1286, %v313
  %vm1288 = vcmp.gt.f32.partialorder %v1287, 0.0
  %v1289 = vmul.f32 %v1287, 0.01
  %v1290 = vsel %vm1288, %v1287, %v1289
  %v1291 = vpack.c.bf16 %v1290, %v1290
  %s1292 = scalar_lea.vmem %s4, 168
  %v1293 = vld [vmem:[%s1292] sm:$0xf]
  %v1294 = vld [vmem:[%s1292 + $0x4] sm:$0xf]
  %v1295 = vld [vmem:[%s1292 + $0x8] sm:$0xf]
  %v1296 = vld [vmem:[%s1292 + $0xc] sm:$0xf]
  %v1297 = vld [vmem:[%s1292 + $0x10] sm:$0xf]
  %v1298 = vld [vmem:[%s1292 + $0x14] sm:$0xf]
  %v1299 = vld [vmem:[%s1292 + $0x18] sm:$0xf]
  %v1307 = vunpack.c.l.b16 %v1293
  %v1308 = vunpack.c.l.b16 %v1294
  %v1309 = vunpack.c.l.b16 %v1295
  %v1310 = vunpack.c.l.b16 %v1296
  %v1311 = vunpack.c.l.b16 %v1297
  %v1312 = vunpack.c.l.b16 %v1298
  %v1313 = vunpack.c.l.b16 %v1299
  %v1314 = vpack.c.b16 %v1308, %v1307
  %v1315 = vpack.c.b16 %v1310, %v1309
  %v1316 = vpack.c.b16 %v1312, %v1311
  %v1317 = vpack.c.b16 %v1313, %v1313
  %v1322 = vsel %vm348, %v1291, 0
  %v1325 = vsel %vm85, %v1317, 0
  %1327 = vmatprep.subr.bf16.mxu0 0
  %1328 = vmatpush1.bf16.msra.mxu0 0
  %1329 = vmatprep.subr.bf16.mxu0 0
  %1330 = vmatpush1.bf16.msra.mxu0 0
  %1331 = vmatprep.subr.bf16.mxu0 0
  %1332 = vmatpush1.bf16.msra.mxu0 0
  %1333 = vmatprep.subr.bf16.mxu0 0
  %1334 = vmatpush1.bf16.msra.mxu0 0
  %1335 = vmatprep.subr.bf16.mxu0 0
  %1336 = vmatpush1.bf16.msra.mxu0 %v1325
  %1337 = vmatprep.subr.bf16.mxu0 0
  %1338 = vmatpush1.bf16.msra.mxu0 %v1316
  %1339 = vmatprep.subr.bf16.mxu0 0
  %1340 = vmatpush1.bf16.msra.mxu0 %v1315
  %1341 = vmatprep.subr.bf16.mxu0 0
  %1342 = vmatpush1.bf16.msra.mxu0 %v1314
  %1343 = vmatprep.subr.bf16.mxu0 0
  %1344 = vmatpush2.bf16.msra.mxu0 0
  %1345 = vmatprep.subr.bf16.mxu0 0
  %1346 = vmatpush2.bf16.msra.mxu0 0
  %1347 = vmatprep.subr.bf16.mxu0 0
  %1348 = vmatpush2.bf16.msra.mxu0 0
  %1349 = vmatprep.subr.bf16.mxu0 0
  %1350 = vmatpush2.bf16.msra.mxu0 0
  %1351 = vmatprep.subr.bf16.mxu0 0
  %1352 = vmatpush2.bf16.msra.mxu0 0
  %1353 = vmatprep.subr.bf16.mxu0 0
  %1354 = vmatpush2.bf16.msra.mxu0 0
  %1355 = vmatprep.subr.bf16.mxu0 0
  %1356 = vmatpush2.bf16.msra.mxu0 0
  %1357 = vmatprep.subr.bf16.mxu0 0
  %1358 = vmatpush2.bf16.msra.mxu0 0
  %1359 = vmatprep.mubr.bf16.mxu0 0
  %1360 = vmatmul.mubr.bf16.gmra.mxu0 %v1322
  %v1361 = vpop.f32.mrf.mxu0
  %v1362 = vadd.f32 0.0, %v1361
  %v1363 = vpop.f32.mrf.mxu0
  %v1364 = vpop.f32.mrf.mxu0
  %v1365 = vpop.f32.mrf.mxu0
  %1366 = vdwg.mxu0
  %v1367 = vadd.f32 %v1205, %v1362
  %vm1368 = vcmp.gt.f32.partialorder %v1367, 0.0
  %v1369 = vmul.f32 %v1367, 0.01
  %v1370 = vsel %vm1368, %v1367, %v1369
  %v1371 = vpack.c.bf16 %v1370, %v1370
  %v1372 = vld [vmem:[%s7] sm:$0xf]
  %v1373 = vld [vmem:[%s7 + $0x4] sm:$0xf]
  %v1374 = vld [vmem:[%s7 + $0x8] sm:$0xf]
  %v1375 = vld [vmem:[%s7 + $0xc] sm:$0xf]
  %v1376 = vld [vmem:[%s8] sm:$0x1]
  %v1378 = vlaneseq
  %v1379 = vshrl.u32 %v1378, 7
  %v1380 = vsub.s32 0, %v1379
  %v1381 = vrot.slane %v1376, %v1380
  %v1387 = vunpack.c.l.b16 %v1372
  %v1388 = vunpack.c.l.b16 %v1373
  %v1389 = vunpack.c.l.b16 %v1374
  %v1390 = vunpack.c.l.b16 %v1375
  %v1391 = vpack.c.b16 %v1388, %v1387
  %v1392 = vpack.c.b16 %v1390, %v1389
  %vm1395 = vcmask 261120
  %v1397 = vsel %vm1395, %v1371, 0
  %1399 = vmatprep.subr.bf16.mxu0 0
  %1400 = vmatpush1.bf16.msra.mxu0 0
  %1401 = vmatprep.subr.bf16.mxu0 0
  %1402 = vmatpush1.bf16.msra.mxu0 0
  %1403 = vmatprep.subr.bf16.mxu0 0
  %1404 = vmatpush1.bf16.msra.mxu0 0
  %1405 = vmatprep.subr.bf16.mxu0 0
  %1406 = vmatpush1.bf16.msra.mxu0 0
  %1407 = vmatprep.subr.bf16.mxu0 0
  %1408 = vmatpush1.bf16.msra.mxu0 0
  %1409 = vmatprep.subr.bf16.mxu0 0
  %1410 = vmatpush1.bf16.msra.mxu0 0
  %1411 = vmatprep.subr.bf16.mxu0 0
  %1412 = vmatpush1.bf16.msra.mxu0 %v1392
  %1413 = vmatprep.subr.bf16.mxu0 0
  %1414 = vmatpush1.bf16.msra.mxu0 %v1391
  %1415 = vmatprep.subr.bf16.mxu0 0
  %1416 = vmatpush2.bf16.msra.mxu0 0
  %1417 = vmatprep.subr.bf16.mxu0 0
  %1418 = vmatpush2.bf16.msra.mxu0 0
  %1419 = vmatprep.subr.bf16.mxu0 0
  %1420 = vmatpush2.bf16.msra.mxu0 0
  %1421 = vmatprep.subr.bf16.mxu0 0
  %1422 = vmatpush2.bf16.msra.mxu0 0
  %1423 = vmatprep.subr.bf16.mxu0 0
  %1424 = vmatpush2.bf16.msra.mxu0 0
  %1425 = vmatprep.subr.bf16.mxu0 0
  %1426 = vmatpush2.bf16.msra.mxu0 0
  %1427 = vmatprep.subr.bf16.mxu0 0
  %1428 = vmatpush2.bf16.msra.mxu0 0
  %1429 = vmatprep.subr.bf16.mxu0 0
  %1430 = vmatpush2.bf16.msra.mxu0 0
  %1431 = vmatprep.mubr.bf16.mxu0 0
  %1432 = vmatmul.mubr.bf16.gmra.mxu0 %v1397
  %v1433 = vpop.f32.mrf.mxu0
  %v1434 = vadd.f32 %v1381, %v1433
  %v1435 = vpop.f32.mrf.mxu0
  %v1436 = vpop.f32.mrf.mxu0
  %v1437 = vpop.f32.mrf.mxu0
  %1438 = vdwg.mxu0
  %vm1439 = vcmp.gt.f32.partialorder %v1434, 0.0
  %v1440 = vmul.f32 %v1434, 0.01
  %v1441 = vsel %vm1439, %v1434, %v1440
  %v1442 = vpack.c.bf16 %v1441, %v1441
  %v1443 = vld [vmem:[%s9] sm:$0xf]
  %v1444 = vld [vmem:[%s9 + $0x4] sm:$0xf]
  %v1445 = vld [vmem:[%s10] sm:$0x1]
  %v1447 = vlaneseq
  %v1448 = vshrl.u32 %v1447, 7
  %v1449 = vsub.s32 0, %v1448
  %v1450 = vrot.slane %v1445, %v1449
  %v1454 = vunpack.c.l.b16 %v1443
  %v1455 = vunpack.c.l.b16 %v1444
  %v1456 = vpack.c.b16 %v1455, %v1454
  %vm1458 = vcmask 130048
  %v1460 = vsel %vm1458, %v1442, 0
  %1462 = vmatprep.subr.bf16.mxu0 0
  %1463 = vmatpush1.bf16.msra.mxu0 0
  %1464 = vmatprep.subr.bf16.mxu0 0
  %1465 = vmatpush1.bf16.msra.mxu0 0
  %1466 = vmatprep.subr.bf16.mxu0 0
  %1467 = vmatpush1.bf16.msra.mxu0 0
  %1468 = vmatprep.subr.bf16.mxu0 0
  %1469 = vmatpush1.bf16.msra.mxu0 0
  %1470 = vmatprep.subr.bf16.mxu0 0
  %1471 = vmatpush1.bf16.msra.mxu0 0
  %1472 = vmatprep.subr.bf16.mxu0 0
  %1473 = vmatpush1.bf16.msra.mxu0 0
  %1474 = vmatprep.subr.bf16.mxu0 0
  %1475 = vmatpush1.bf16.msra.mxu0 0
  %1476 = vmatprep.subr.bf16.mxu0 0
  %1477 = vmatpush1.bf16.msra.mxu0 %v1456
  %1478 = vmatprep.subr.bf16.mxu0 0
  %1479 = vmatpush2.bf16.msra.mxu0 0
  %1480 = vmatprep.subr.bf16.mxu0 0
  %1481 = vmatpush2.bf16.msra.mxu0 0
  %1482 = vmatprep.subr.bf16.mxu0 0
  %1483 = vmatpush2.bf16.msra.mxu0 0
  %1484 = vmatprep.subr.bf16.mxu0 0
  %1485 = vmatpush2.bf16.msra.mxu0 0
  %1486 = vmatprep.subr.bf16.mxu0 0
  %1487 = vmatpush2.bf16.msra.mxu0 0
  %1488 = vmatprep.subr.bf16.mxu0 0
  %1489 = vmatpush2.bf16.msra.mxu0 0
  %1490 = vmatprep.subr.bf16.mxu0 0
  %1491 = vmatpush2.bf16.msra.mxu0 0
  %1492 = vmatprep.subr.bf16.mxu0 0
  %1493 = vmatpush2.bf16.msra.mxu0 0
  %1494 = vmatprep.mubr.bf16.mxu0 0
  %1495 = vmatmul.mubr.bf16.gmra.mxu0 %v1460
  %v1496 = vpop.f32.mrf.mxu0
  %v1497 = vadd.f32 %v1450, %v1496
  %v1498 = vpop.f32.mrf.mxu0
  %v1499 = vpop.f32.mrf.mxu0
  %v1500 = vpop.f32.mrf.mxu0
  %1501 = vdwg.mxu0
  %vm1502 = vcmask 48128
  %1503 = vst.msk [vmem:[%s11] sm:$0xff] %vm1502, %v1497
  // Predicated region
  $region46: #{policy_forward.1} parent=0 // pred_check
    _
  $region47: #{policy_forward.1} parent=0 // pred_check_branch
    %1505 = sbr.rel (0) target = $region49
  $region48: #{policy_forward.1} parent=0 // pred_region
    _
  $region49: #{policy_forward.1} parent=0 // pred_fallthru
    _
  // Predicated region
  $region50: #{policy_forward.1} parent=0 // pred_check
    _
  $region51: #{policy_forward.1} parent=0 // pred_check_branch
    %1507 = sbr.rel (0) target = $region53
  $region52: #{policy_forward.1} parent=0 // pred_region
    _
  $region53: #{policy_forward.1} parent=0 // pred_fallthru
    _

</llo_original>
